<compile_context>
chip_gen: v7x
topology: tpu7x:2x2x1
jax: 0.10.0
libtpu: 0.0.40
codegen_flags: <defaults>
</compile_context>

<pallas_src>
import math
import functools

import jax
import jax.numpy as jnp
from jax.experimental import pallas as pl
from jax.experimental.pallas import tpu as pltpu


# ----------------------------------------------------------------------------
# In-kernel helpers
# ----------------------------------------------------------------------------
def _layernorm(x, gamma, beta, eps=1e-5):
    mu = jnp.mean(x, axis=-1, keepdims=True)
    var = jnp.mean((x - mu) ** 2, axis=-1, keepdims=True)
    return (x - mu) * jax.lax.rsqrt(var + eps) * gamma + beta


# ----------------------------------------------------------------------------
# Single fused kernel: all encoder layers + masked mean pool + classifier.
# Grid = (num_layers,); activation slab persists in VMEM scratch.
# ----------------------------------------------------------------------------
def fused_transformer_kernel(B, S, n_heads,
                             x0_ref, kb_ref, poolw_ref, wout_ref, bout_ref,
                             wqkv_ref, bqkv_ref, wo_ref, bo_ref,
                             g1_ref, be1_ref, w1_ref, b1_ref,
                             w2_ref, b2_ref, g2_ref, be2_ref,
                             out_ref, x_scratch):
    layer = pl.program_id(0)
    num_layers = pl.num_programs(0)

    @pl.when(layer == 0)
    def _():
        x_scratch[...] = x0_ref[...]

    x = x_scratch[...]                       # (B*S, D) f32, VMEM-resident
    BS, D = x.shape
    Dh = D // n_heads
    scale = 1.0 / math.sqrt(Dh)

    # ---- fused QKV projection (bf16 operands, f32 accumulation) ----
    x_bf = x.astype(jnp.bfloat16)
    qkv = jnp.dot(x_bf, wqkv_ref[0],
                  preferred_element_type=jnp.float32) + bqkv_ref[0]   # (BS, 3D)
    q = qkv[:, 0 * D:1 * D].reshape(B, S, D).astype(jnp.bfloat16)
    k = qkv[:, 1 * D:2 * D].reshape(B, S, D).astype(jnp.bfloat16)
    v = qkv[:, 2 * D:3 * D].reshape(B, S, D).astype(jnp.bfloat16)

    key_bias = kb_ref[...]                   # (B, 1, S): -1e9 at padded keys
    wo = wo_ref[0]                           # (D, D) bf16

    # ---- multi-head attention: batched over B, Wo folded per head ----
    # (Static head loop lowers cleanly; per-head work is batched einsums so
    #  the MXU sees B-batched (S, Dh) x (Dh, S) tiles, not a lane concat.)
    attn = jnp.zeros((BS, D), jnp.float32)
    for h in range(n_heads):
        sl = slice(h * Dh, (h + 1) * Dh)
        s = jnp.einsum('bqd,bkd->bqk', q[:, :, sl], k[:, :, sl],
                       preferred_element_type=jnp.float32) * scale
        s = s + key_bias
        s = s - jnp.max(s, axis=-1, keepdims=True)
        p = jnp.exp(s)
        p = p * pl.reciprocal(jnp.sum(p, axis=-1, keepdims=True), approx=True)
        ctx = jnp.einsum('bqk,bkd->bqd', p.astype(jnp.bfloat16), v[:, :, sl],
                         preferred_element_type=jnp.float32)          # (B, S, Dh)
        # fold the output projection of this head directly (no lane concat)
        attn = attn + jnp.dot(ctx.reshape(BS, Dh).astype(jnp.bfloat16), wo[sl, :],
                              preferred_element_type=jnp.float32)
    attn = attn + bo_ref[0]

    # ---- post-norm residual blocks (PyTorch default norm_first=False) ----
    x1 = _layernorm(x + attn, g1_ref[0], be1_ref[0])
    h1 = jnp.maximum(
        jnp.dot(x1.astype(jnp.bfloat16), w1_ref[0],
                preferred_element_type=jnp.float32) + b1_ref[0], 0.0)
    ff = jnp.dot(h1.astype(jnp.bfloat16), w2_ref[0],
                 preferred_element_type=jnp.float32) + b2_ref[0]
    x2 = _layernorm(x1 + ff, g2_ref[0], be2_ref[0])

    # carry the activation to the next layer (skip writeback on the last step)
    @pl.when(layer < num_layers - 1)
    def _():
        x_scratch[...] = x2

    # ---- final step: masked mean pool (as one matmul) + classifier ----
    @pl.when(layer == num_layers - 1)
    def _():
        pooled = jnp.dot(poolw_ref[...], x2,
                         preferred_element_type=jnp.float32)          # (B, D)
        out_ref[...] = (jnp.dot(pooled, wout_ref[...],
                                preferred_element_type=jnp.float32)
                        + bout_ref[...])


# ----------------------------------------------------------------------------
# Parameter prep: stack per-layer weights on a leading layer axis, fuse QKV,
# cast weight-heavy matrices to bf16.
# ----------------------------------------------------------------------------
def prepare_fused_params(params):
    layers = params["layers"]

    def stack(name):
        return jnp.stack([lp[name] for lp in layers], axis=0)

    wqkv = jnp.stack(
        [jnp.concatenate([lp["wq"], lp["wk"], lp["wv"]], axis=1) for lp in layers],
        axis=0).astype(jnp.bfloat16)
    bqkv = jnp.stack(
        [jnp.concatenate([lp["bq"], lp["bk"], lp["bv"]], axis=1) for lp in layers],
        axis=0)
    return {
        "num_layers": len(layers),
        "n_heads": params["n_heads"],
        "embedding": params["embedding"],
        "pe": params["pe"],
        "wqkv": wqkv, "bqkv": bqkv,
        "wo": stack("wo").astype(jnp.bfloat16), "bo": stack("bo"),
        "g1": stack("g1"), "be1": stack("be1"),
        "w1": stack("w1").astype(jnp.bfloat16), "b1": stack("b1"),
        "w2": stack("w2").astype(jnp.bfloat16), "b2": stack("b2"),
        "g2": stack("g2"), "be2": stack("be2"),
        "w_out": params["w_out"], "b_out": params["b_out"],
    }


# ----------------------------------------------------------------------------
# Forward pass wrapper
# ----------------------------------------------------------------------------
def transformer_classifier_forward(src, src_key_padding_mask, fp):
    # src: (B, S) int32 token ids; src_key_padding_mask: (B, S) bool, True = pad
    B, S = src.shape
    D = fp["embedding"].shape[1]
    L = fp["num_layers"]
    H = fp["n_heads"]
    F = fp["w1"].shape[2]
    C = fp["w_out"].shape[1]
    BS = B * S

    # ---- glue (plain XLA): embedding gather + positional encoding ----
    # TODO(synk): embedding row-gather and the sin/cos table stay outside the
    # Pallas kernel (no benefit from a hand-written gather at these sizes).
    emb = fp["embedding"][src]
    x = emb * jnp.sqrt(jnp.float32(D)) + fp["pe"][:S][None, :, :]
    x0 = x.reshape(BS, D).astype(jnp.float32)

    valid = (~src_key_padding_mask).astype(jnp.float32)            # (B, S)
    key_bias = ((1.0 - valid) * (-1e9))[:, None, :]                # (B, 1, S)
    count = jnp.maximum(jnp.sum(valid, axis=-1, keepdims=True), 1.0)
    # block-diagonal pooling matrix: pool_w[b, b*S + s] = valid[b, s] / count[b]
    pool_w = (jnp.eye(B, dtype=jnp.float32)[:, :, None]
              * (valid / count)[None, :, :]).reshape(B, BS)        # (B, B*S)

    kernel = functools.partial(fused_transformer_kernel, B, S, H)

    def per_layer(shape):
        return pl.BlockSpec((1,) + shape, lambda l: (l,) + (0,) * len(shape))

    def shared(shape):
        return pl.BlockSpec(shape, lambda l: (0,) * len(shape))

    logits = pl.pallas_call(
        kernel,
        out_shape=jax.ShapeDtypeStruct((B, C), jnp.float32),
        grid=(L,),
        in_specs=[
            shared((BS, D)),        # x0
            shared((B, 1, S)),      # key-padding additive bias
            shared((B, BS)),        # pooling matrix
            shared((D, C)),         # classifier weight
            shared((1, C)),         # classifier bias
            per_layer((D, 3 * D)),  # fused QKV weight (bf16)
            per_layer((1, 3 * D)),  # fused QKV bias
            per_layer((D, D)),      # out-proj weight (bf16)
            per_layer((1, D)),      # out-proj bias
            per_layer((1, D)),      # ln1 gamma
            per_layer((1, D)),      # ln1 beta
            per_layer((D, F)),      # ffn w1 (bf16)
            per_layer((1, F)),      # ffn b1
            per_layer((F, D)),      # ffn w2 (bf16)
            per_layer((1, D)),      # ffn b2
            per_layer((1, D)),      # ln2 gamma
            per_layer((1, D)),      # ln2 beta
        ],
        out_specs=pl.BlockSpec((B, C), lambda l: (0, 0)),
        scratch_shapes=[pltpu.VMEM((BS, D), jnp.float32)],
        compiler_params=pltpu.CompilerParams(
            dimension_semantics=("arbitrary",)),   # layer axis is sequential
    )(x0, key_bias, pool_w, fp["w_out"], fp["b_out"],
      fp["wqkv"], fp["bqkv"], fp["wo"], fp["bo"],
      fp["g1"], fp["be1"], fp["w1"], fp["b1"],
      fp["w2"], fp["b2"], fp["g2"], fp["be2"])
    return logits


# ----------------------------------------------------------------------------
# Init: positional encoding, random parameters
# ----------------------------------------------------------------------------
def positional_encoding(max_len, d_model):
    position = jnp.arange(max_len, dtype=jnp.float32)[:, None]
    div_term = jnp.exp(jnp.arange(0, d_model, 2, dtype=jnp.float32)
                       * (-math.log(10000.0) / d_model))
    pe = jnp.zeros((max_len, d_model), jnp.float32)
    pe = pe.at[:, 0::2].set(jnp.sin(position * div_term))
    pe = pe.at[:, 1::2].set(jnp.cos(position * div_term))   # d_model chosen even
    return pe


def init_layer_params(key, d_model, dim_ff):
    ks = jax.random.split(key, 6)
    s = 0.05
    return {
        "wq": s * jax.random.normal(ks[0], (d_model, d_model), jnp.float32),
        "bq": jnp.zeros((1, d_model), jnp.float32),
        "wk": s * jax.random.normal(ks[1], (d_model, d_model), jnp.float32),
        "bk": jnp.zeros((1, d_model), jnp.float32),
        "wv": s * jax.random.normal(ks[2], (d_model, d_model), jnp.float32),
        "bv": jnp.zeros((1, d_model), jnp.float32),
        "wo": s * jax.random.normal(ks[3], (d_model, d_model), jnp.float32),
        "bo": jnp.zeros((1, d_model), jnp.float32),
        "g1": jnp.ones((1, d_model), jnp.float32),
        "be1": jnp.zeros((1, d_model), jnp.float32),
        "w1": s * jax.random.normal(ks[4], (d_model, dim_ff), jnp.float32),
        "b1": jnp.zeros((1, dim_ff), jnp.float32),
        "w2": s * jax.random.normal(ks[5], (dim_ff, d_model), jnp.float32),
        "b2": jnp.zeros((1, d_model), jnp.float32),
        "g2": jnp.ones((1, d_model), jnp.float32),
        "be2": jnp.zeros((1, d_model), jnp.float32),
    }


def init_params(key, vocab_size, d_model, n_heads, num_layers, dim_ff, num_classes,
                max_len=500):
    keys = jax.random.split(key, num_layers + 2)
    return {
        "n_heads": n_heads,
        "embedding": 0.1 * jax.random.normal(keys[0], (vocab_size, d_model), jnp.float32),
        "pe": positional_encoding(max_len, d_model),
        "layers": [init_layer_params(keys[1 + i], d_model, dim_ff)
                   for i in range(num_layers)],
        "w_out": 0.05 * jax.random.normal(keys[-1], (d_model, num_classes), jnp.float32),
        "b_out": jnp.zeros((1, num_classes), jnp.float32),
    }


if __name__ == "__main__":
    vocab_size, d_model, n_heads = 50, 32, 4
    num_encoder_layers, dim_feedforward, num_classes = 2, 64, 5
    B, S = 2, 8

    key = jax.random.PRNGKey(0)
    k_params, k_src = jax.random.split(key)
    params = init_params(k_params, vocab_size, d_model, n_heads,
                         num_encoder_layers, dim_feedforward, num_classes)
    fused = prepare_fused_params(params)

    src = jax.random.randint(k_src, (B, S), 0, vocab_size, dtype=jnp.int32)
    src_key_padding_mask = jnp.zeros((B, S), dtype=bool).at[1, 6:].set(True)

    logits = transformer_classifier_forward(src, src_key_padding_mask, fused)
    jax.block_until_ready(logits)
    assert logits.shape == (B, num_classes)
    print("KERNEL_OK")
</pallas_src>

<mosaic_0001>
module attributes {stable_mosaic.version = 11 : i64} {
  func.func @fused_transformer_kernel(%arg0: i32, %arg1: memref<16x32xf32, #tpu.memory_space<vmem>>, %arg2: memref<2x1x8xf32, #tpu.memory_space<vmem>>, %arg3: memref<2x16xf32, #tpu.memory_space<vmem>>, %arg4: memref<32x5xf32, #tpu.memory_space<vmem>>, %arg5: memref<1x5xf32, #tpu.memory_space<vmem>>, %arg6: memref<1x32x96xbf16, #tpu.memory_space<vmem>>, %arg7: memref<1x1x96xf32, #tpu.memory_space<vmem>>, %arg8: memref<1x32x32xbf16, #tpu.memory_space<vmem>>, %arg9: memref<1x1x32xf32, #tpu.memory_space<vmem>>, %arg10: memref<1x1x32xf32, #tpu.memory_space<vmem>>, %arg11: memref<1x1x32xf32, #tpu.memory_space<vmem>>, %arg12: memref<1x32x64xbf16, #tpu.memory_space<vmem>>, %arg13: memref<1x1x64xf32, #tpu.memory_space<vmem>>, %arg14: memref<1x64x32xbf16, #tpu.memory_space<vmem>>, %arg15: memref<1x1x32xf32, #tpu.memory_space<vmem>>, %arg16: memref<1x1x32xf32, #tpu.memory_space<vmem>>, %arg17: memref<1x1x32xf32, #tpu.memory_space<vmem>>, %arg18: memref<2x5xf32, #tpu.memory_space<vmem>>, %arg19: memref<16x32xf32, #tpu.memory_space<vmem>>) attributes {dimension_semantics = [#tpu.dimension_semantics<arbitrary>], iteration_bounds = array<i64: 2>, scalar_prefetch = 0 : i64, scratch_operands = 1 : i64, tpu.core_type = #tpu.core_type<tc>, window_params = [{pipeline_mode = #tpu.pipeline_mode<synchronous>, transform_indices = @transform_0, window_bounds = array<i64: 16, 32>}, {pipeline_mode = #tpu.pipeline_mode<synchronous>, transform_indices = @transform_1, window_bounds = array<i64: 2, 1, 8>}, {pipeline_mode = #tpu.pipeline_mode<synchronous>, transform_indices = @transform_2, window_bounds = array<i64: 2, 16>}, {pipeline_mode = #tpu.pipeline_mode<synchronous>, transform_indices = @transform_3, window_bounds = array<i64: 32, 5>}, {pipeline_mode = #tpu.pipeline_mode<synchronous>, transform_indices = @transform_4, window_bounds = array<i64: 1, 5>}, {transform_indices = @transform_5, window_bounds = array<i64: 1, 32, 96>}, {transform_indices = @transform_6, window_bounds = array<i64: 1, 1, 96>}, {transform_indices = @transform_7, window_bounds = array<i64: 1, 32, 32>}, {transform_indices = @transform_8, window_bounds = array<i64: 1, 1, 32>}, {transform_indices = @transform_9, window_bounds = array<i64: 1, 1, 32>}, {transform_indices = @transform_10, window_bounds = array<i64: 1, 1, 32>}, {transform_indices = @transform_11, window_bounds = array<i64: 1, 32, 64>}, {transform_indices = @transform_12, window_bounds = array<i64: 1, 1, 64>}, {transform_indices = @transform_13, window_bounds = array<i64: 1, 64, 32>}, {transform_indices = @transform_14, window_bounds = array<i64: 1, 1, 32>}, {transform_indices = @transform_15, window_bounds = array<i64: 1, 1, 32>}, {transform_indices = @transform_16, window_bounds = array<i64: 1, 1, 32>}, {pipeline_mode = #tpu.pipeline_mode<synchronous>, transform_indices = @transform_17, window_bounds = array<i64: 2, 5>}]} {
    %c0_i32 = arith.constant 0 : i32
    %0 = arith.cmpi eq, %arg0, %c0_i32 : i32
    %1 = arith.extui %0 : i1 to i32
    %c0_i32_0 = arith.constant 0 : i32
    %2 = arith.cmpi ne, %1, %c0_i32_0 : i32
    scf.if %2 {
      %c0_82 = arith.constant 0 : index
      %c0_83 = arith.constant 0 : index
      %207 = vector.load %arg1[%c0_82, %c0_83] : memref<16x32xf32, #tpu.memory_space<vmem>>, vector<16x32xf32>
      %c0_84 = arith.constant 0 : index
      %c0_85 = arith.constant 0 : index
      %208 = vector.load %arg19[%c0_84, %c0_85] : memref<16x32xf32, #tpu.memory_space<vmem>>, vector<16x32xf32>
      tpu.vector_store %arg19[%c0_84, %c0_85], %207 {strides = array<i32>} : memref<16x32xf32, #tpu.memory_space<vmem>>, vector<16x32xf32>,
    } else {
    }
    %c0 = arith.constant 0 : index
    %c0_1 = arith.constant 0 : index
    %3 = vector.load %arg19[%c0, %c0_1] : memref<16x32xf32, #tpu.memory_space<vmem>>, vector<16x32xf32>
    %4 = arith.truncf %3 : vector<16x32xf32> to vector<16x32xbf16>
    %c0_2 = arith.constant 0 : index
    %c0_3 = arith.constant 0 : index
    %c0_4 = arith.constant 0 : index
    %5 = vector.load %arg6[%c0_2, %c0_3, %c0_4] : memref<1x32x96xbf16, #tpu.memory_space<vmem>>, vector<1x32x96xbf16>
    %6 = vector.shape_cast %5 : vector<1x32x96xbf16> to vector<32x96xbf16>
    %cst = arith.constant dense<0.000000e+00> : vector<16x96xf32>
    %7 = tpu.matmul %4, %6, %cst {dimension_numbers = #tpu.dot_dimension_numbers<[1], [0], [0], [1], [0, 0, 1, 1], [], []>} : vector<16x32xbf16>, vector<32x96xbf16>, vector<16x96xf32> -> vector<16x96xf32>
    %c0_5 = arith.constant 0 : index
    %c0_6 = arith.constant 0 : index
    %c0_7 = arith.constant 0 : index
    %8 = vector.load %arg7[%c0_5, %c0_6, %c0_7] : memref<1x1x96xf32, #tpu.memory_space<vmem>>, vector<1x1x96xf32>
    %9 = vector.shape_cast %8 : vector<1x1x96xf32> to vector<1x96xf32>
    %10 = vector.broadcast %9 : vector<1x96xf32> to vector<16x96xf32>
    %11 = arith.addf %7, %10 : vector<16x96xf32>
    %12 = vector.extract_strided_slice %11 {offsets = [0, 0], sizes = [16, 32], strides = [1, 1]} : vector<16x96xf32> to vector<16x32xf32>
    %13 = vector.shape_cast %12 : vector<16x32xf32> to vector<2x8x32xf32>
    %14 = arith.truncf %13 : vector<2x8x32xf32> to vector<2x8x32xbf16>
    %15 = vector.extract_strided_slice %11 {offsets = [0, 32], sizes = [16, 32], strides = [1, 1]} : vector<16x96xf32> to vector<16x32xf32>
    %16 = vector.shape_cast %15 : vector<16x32xf32> to vector<2x8x32xf32>
    %17 = arith.truncf %16 : vector<2x8x32xf32> to vector<2x8x32xbf16>
    %18 = vector.extract_strided_slice %11 {offsets = [0, 64], sizes = [16, 32], strides = [1, 1]} : vector<16x96xf32> to vector<16x32xf32>
    %19 = vector.shape_cast %18 : vector<16x32xf32> to vector<2x8x32xf32>
    %20 = arith.truncf %19 : vector<2x8x32xf32> to vector<2x8x32xbf16>
    %c0_8 = arith.constant 0 : index
    %c0_9 = arith.constant 0 : index
    %c0_10 = arith.constant 0 : index
    %21 = vector.load %arg2[%c0_8, %c0_9, %c0_10] : memref<2x1x8xf32, #tpu.memory_space<vmem>>, vector<2x1x8xf32>
    %c0_11 = arith.constant 0 : index
    %c0_12 = arith.constant 0 : index
    %c0_13 = arith.constant 0 : index
    %22 = vector.load %arg8[%c0_11, %c0_12, %c0_13] : memref<1x32x32xbf16, #tpu.memory_space<vmem>>, vector<1x32x32xbf16>
    %23 = vector.shape_cast %22 : vector<1x32x32xbf16> to vector<32x32xbf16>
    %cst_14 = arith.constant 0.000000e+00 : f32
    %24 = vector.broadcast %cst_14 : f32 to vector<16x32xf32>
    %25 = vector.extract_strided_slice %14 {offsets = [0, 0, 0], sizes = [2, 8, 8], strides = [1, 1, 1]} : vector<2x8x32xbf16> to vector<2x8x8xbf16>
    %26 = vector.extract_strided_slice %17 {offsets = [0, 0, 0], sizes = [2, 8, 8], strides = [1, 1, 1]} : vector<2x8x32xbf16> to vector<2x8x8xbf16>
    "tpu.trace_start"() <{level = 10 : i32, message = "bqd,bkd->bqk"}> : () -> ()
    %cst_15 = arith.constant dense<0.000000e+00> : vector<2x8x8xf32>
    %27 = tpu.matmul %25, %26, %cst_15 {dimension_numbers = #tpu.dot_dimension_numbers<[2], [2], [1], [1], [0, 0, 0, 1, 1, 1], [0], [0]>} : vector<2x8x8xbf16>, vector<2x8x8xbf16>, vector<2x8x8xf32> -> vector<2x8x8xf32>
    "tpu.trace_stop"() : () -> ()
    %cst_16 = arith.constant 0.353553385 : f32
    %28 = vector.broadcast %cst_16 : f32 to vector<2x8x8xf32>
    %29 = arith.mulf %27, %28 : vector<2x8x8xf32>
    %30 = vector.broadcast %21 : vector<2x1x8xf32> to vector<2x8x8xf32>
    %31 = arith.addf %29, %30 : vector<2x8x8xf32>
    %cst_17 = arith.constant dense<0xFF800000> : vector<2x8xf32>
    %32 = vector.multi_reduction <maximumf>, %31, %cst_17 [2] : vector<2x8x8xf32> to vector<2x8xf32>
    %33 = vector.shape_cast %32 : vector<2x8xf32> to vector<2x8x1xf32>
    %34 = vector.broadcast %33 : vector<2x8x1xf32> to vector<2x8x8xf32>
    %35 = arith.subf %31, %34 : vector<2x8x8xf32>
    %36 = math.exp %35 : vector<2x8x8xf32>
    %cst_18 = arith.constant dense<0.000000e+00> : vector<2x8xf32>
    %37 = vector.multi_reduction <add>, %36, %cst_18 [2] : vector<2x8x8xf32> to vector<2x8xf32>
    %38 = vector.shape_cast %37 : vector<2x8xf32> to vector<2x8x1xf32>
    %39 = tpu.reciprocal %38 {approx = true} : vector<2x8x1xf32> -> vector<2x8x1xf32>
    %40 = vector.broadcast %39 : vector<2x8x1xf32> to vector<2x8x8xf32>
    %41 = arith.mulf %36, %40 : vector<2x8x8xf32>
    %42 = arith.truncf %41 : vector<2x8x8xf32> to vector<2x8x8xbf16>
    %43 = vector.extract_strided_slice %20 {offsets = [0, 0, 0], sizes = [2, 8, 8], strides = [1, 1, 1]} : vector<2x8x32xbf16> to vector<2x8x8xbf16>
    "tpu.trace_start"() <{level = 10 : i32, message = "bqk,bkd->bqd"}> : () -> ()
    %cst_19 = arith.constant dense<0.000000e+00> : vector<2x8x8xf32>
    %44 = tpu.matmul %42, %43, %cst_19 {dimension_numbers = #tpu.dot_dimension_numbers<[2], [1], [1], [2], [0, 0, 0, 1, 1, 2], [0], [0]>} : vector<2x8x8xbf16>, vector<2x8x8xbf16>, vector<2x8x8xf32> -> vector<2x8x8xf32>
    "tpu.trace_stop"() : () -> ()
    %45 = vector.shape_cast %44 : vector<2x8x8xf32> to vector<16x8xf32>
    %46 = arith.truncf %45 : vector<16x8xf32> to vector<16x8xbf16>
    %47 = vector.extract_strided_slice %23 {offsets = [0, 0], sizes = [8, 32], strides = [1, 1]} : vector<32x32xbf16> to vector<8x32xbf16>
    %cst_20 = arith.constant dense<0.000000e+00> : vector<16x32xf32>
    %48 = tpu.matmul %46, %47, %cst_20 {dimension_numbers = #tpu.dot_dimension_numbers<[1], [0], [0], [1], [0, 0, 1, 1], [], []>} : vector<16x8xbf16>, vector<8x32xbf16>, vector<16x32xf32> -> vector<16x32xf32>
    %49 = arith.addf %24, %48 : vector<16x32xf32>
    %50 = vector.extract_strided_slice %14 {offsets = [0, 0, 8], sizes = [2, 8, 8], strides = [1, 1, 1]} : vector<2x8x32xbf16> to vector<2x8x8xbf16>
    %51 = vector.extract_strided_slice %17 {offsets = [0, 0, 8], sizes = [2, 8, 8], strides = [1, 1, 1]} : vector<2x8x32xbf16> to vector<2x8x8xbf16>
    "tpu.trace_start"() <{level = 10 : i32, message = "bqd,bkd->bqk"}> : () -> ()
    %cst_21 = arith.constant dense<0.000000e+00> : vector<2x8x8xf32>
    %52 = tpu.matmul %50, %51, %cst_21 {dimension_numbers = #tpu.dot_dimension_numbers<[2], [2], [1], [1], [0, 0, 0, 1, 1, 1], [0], [0]>} : vector<2x8x8xbf16>, vector<2x8x8xbf16>, vector<2x8x8xf32> -> vector<2x8x8xf32>
    "tpu.trace_stop"() : () -> ()
    %cst_22 = arith.constant 0.353553385 : f32
    %53 = vector.broadcast %cst_22 : f32 to vector<2x8x8xf32>
    %54 = arith.mulf %52, %53 : vector<2x8x8xf32>
    %55 = vector.broadcast %21 : vector<2x1x8xf32> to vector<2x8x8xf32>
    %56 = arith.addf %54, %55 : vector<2x8x8xf32>
    %cst_23 = arith.constant dense<0xFF800000> : vector<2x8xf32>
    %57 = vector.multi_reduction <maximumf>, %56, %cst_23 [2] : vector<2x8x8xf32> to vector<2x8xf32>
    %58 = vector.shape_cast %57 : vector<2x8xf32> to vector<2x8x1xf32>
    %59 = vector.broadcast %58 : vector<2x8x1xf32> to vector<2x8x8xf32>
    %60 = arith.subf %56, %59 : vector<2x8x8xf32>
    %61 = math.exp %60 : vector<2x8x8xf32>
    %cst_24 = arith.constant dense<0.000000e+00> : vector<2x8xf32>
    %62 = vector.multi_reduction <add>, %61, %cst_24 [2] : vector<2x8x8xf32> to vector<2x8xf32>
    %63 = vector.shape_cast %62 : vector<2x8xf32> to vector<2x8x1xf32>
    %64 = tpu.reciprocal %63 {approx = true} : vector<2x8x1xf32> -> vector<2x8x1xf32>
    %65 = vector.broadcast %64 : vector<2x8x1xf32> to vector<2x8x8xf32>
    %66 = arith.mulf %61, %65 : vector<2x8x8xf32>
    %67 = arith.truncf %66 : vector<2x8x8xf32> to vector<2x8x8xbf16>
    %68 = vector.extract_strided_slice %20 {offsets = [0, 0, 8], sizes = [2, 8, 8], strides = [1, 1, 1]} : vector<2x8x32xbf16> to vector<2x8x8xbf16>
    "tpu.trace_start"() <{level = 10 : i32, message = "bqk,bkd->bqd"}> : () -> ()
    %cst_25 = arith.constant dense<0.000000e+00> : vector<2x8x8xf32>
    %69 = tpu.matmul %67, %68, %cst_25 {dimension_numbers = #tpu.dot_dimension_numbers<[2], [1], [1], [2], [0, 0, 0, 1, 1, 2], [0], [0]>} : vector<2x8x8xbf16>, vector<2x8x8xbf16>, vector<2x8x8xf32> -> vector<2x8x8xf32>
    "tpu.trace_stop"() : () -> ()
    %70 = vector.shape_cast %69 : vector<2x8x8xf32> to vector<16x8xf32>
    %71 = arith.truncf %70 : vector<16x8xf32> to vector<16x8xbf16>
    %72 = vector.extract_strided_slice %23 {offsets = [8, 0], sizes = [8, 32], strides = [1, 1]} : vector<32x32xbf16> to vector<8x32xbf16>
    %cst_26 = arith.constant dense<0.000000e+00> : vector<16x32xf32>
    %73 = tpu.matmul %71, %72, %cst_26 {dimension_numbers = #tpu.dot_dimension_numbers<[1], [0], [0], [1], [0, 0, 1, 1], [], []>} : vector<16x8xbf16>, vector<8x32xbf16>, vector<16x32xf32> -> vector<16x32xf32>
    %74 = arith.addf %49, %73 : vector<16x32xf32>
    %75 = vector.extract_strided_slice %14 {offsets = [0, 0, 16], sizes = [2, 8, 8], strides = [1, 1, 1]} : vector<2x8x32xbf16> to vector<2x8x8xbf16>
    %76 = vector.extract_strided_slice %17 {offsets = [0, 0, 16], sizes = [2, 8, 8], strides = [1, 1, 1]} : vector<2x8x32xbf16> to vector<2x8x8xbf16>
    "tpu.trace_start"() <{level = 10 : i32, message = "bqd,bkd->bqk"}> : () -> ()
    %cst_27 = arith.constant dense<0.000000e+00> : vector<2x8x8xf32>
    %77 = tpu.matmul %75, %76, %cst_27 {dimension_numbers = #tpu.dot_dimension_numbers<[2], [2], [1], [1], [0, 0, 0, 1, 1, 1], [0], [0]>} : vector<2x8x8xbf16>, vector<2x8x8xbf16>, vector<2x8x8xf32> -> vector<2x8x8xf32>
    "tpu.trace_stop"() : () -> ()
    %cst_28 = arith.constant 0.353553385 : f32
    %78 = vector.broadcast %cst_28 : f32 to vector<2x8x8xf32>
    %79 = arith.mulf %77, %78 : vector<2x8x8xf32>
    %80 = vector.broadcast %21 : vector<2x1x8xf32> to vector<2x8x8xf32>
    %81 = arith.addf %79, %80 : vector<2x8x8xf32>
    %cst_29 = arith.constant dense<0xFF800000> : vector<2x8xf32>
    %82 = vector.multi_reduction <maximumf>, %81, %cst_29 [2] : vector<2x8x8xf32> to vector<2x8xf32>
    %83 = vector.shape_cast %82 : vector<2x8xf32> to vector<2x8x1xf32>
    %84 = vector.broadcast %83 : vector<2x8x1xf32> to vector<2x8x8xf32>
    %85 = arith.subf %81, %84 : vector<2x8x8xf32>
    %86 = math.exp %85 : vector<2x8x8xf32>
    %cst_30 = arith.constant dense<0.000000e+00> : vector<2x8xf32>
    %87 = vector.multi_reduction <add>, %86, %cst_30 [2] : vector<2x8x8xf32> to vector<2x8xf32>
    %88 = vector.shape_cast %87 : vector<2x8xf32> to vector<2x8x1xf32>
    %89 = tpu.reciprocal %88 {approx = true} : vector<2x8x1xf32> -> vector<2x8x1xf32>
    %90 = vector.broadcast %89 : vector<2x8x1xf32> to vector<2x8x8xf32>
    %91 = arith.mulf %86, %90 : vector<2x8x8xf32>
    %92 = arith.truncf %91 : vector<2x8x8xf32> to vector<2x8x8xbf16>
    %93 = vector.extract_strided_slice %20 {offsets = [0, 0, 16], sizes = [2, 8, 8], strides = [1, 1, 1]} : vector<2x8x32xbf16> to vector<2x8x8xbf16>
    "tpu.trace_start"() <{level = 10 : i32, message = "bqk,bkd->bqd"}> : () -> ()
    %cst_31 = arith.constant dense<0.000000e+00> : vector<2x8x8xf32>
    %94 = tpu.matmul %92, %93, %cst_31 {dimension_numbers = #tpu.dot_dimension_numbers<[2], [1], [1], [2], [0, 0, 0, 1, 1, 2], [0], [0]>} : vector<2x8x8xbf16>, vector<2x8x8xbf16>, vector<2x8x8xf32> -> vector<2x8x8xf32>
    "tpu.trace_stop"() : () -> ()
    %95 = vector.shape_cast %94 : vector<2x8x8xf32> to vector<16x8xf32>
    %96 = arith.truncf %95 : vector<16x8xf32> to vector<16x8xbf16>
    %97 = vector.extract_strided_slice %23 {offsets = [16, 0], sizes = [8, 32], strides = [1, 1]} : vector<32x32xbf16> to vector<8x32xbf16>
    %cst_32 = arith.constant dense<0.000000e+00> : vector<16x32xf32>
    %98 = tpu.matmul %96, %97, %cst_32 {dimension_numbers = #tpu.dot_dimension_numbers<[1], [0], [0], [1], [0, 0, 1, 1], [], []>} : vector<16x8xbf16>, vector<8x32xbf16>, vector<16x32xf32> -> vector<16x32xf32>
    %99 = arith.addf %74, %98 : vector<16x32xf32>
    %100 = vector.extract_strided_slice %14 {offsets = [0, 0, 24], sizes = [2, 8, 8], strides = [1, 1, 1]} : vector<2x8x32xbf16> to vector<2x8x8xbf16>
    %101 = vector.extract_strided_slice %17 {offsets = [0, 0, 24], sizes = [2, 8, 8], strides = [1, 1, 1]} : vector<2x8x32xbf16> to vector<2x8x8xbf16>
    "tpu.trace_start"() <{level = 10 : i32, message = "bqd,bkd->bqk"}> : () -> ()
    %cst_33 = arith.constant dense<0.000000e+00> : vector<2x8x8xf32>
    %102 = tpu.matmul %100, %101, %cst_33 {dimension_numbers = #tpu.dot_dimension_numbers<[2], [2], [1], [1], [0, 0, 0, 1, 1, 1], [0], [0]>} : vector<2x8x8xbf16>, vector<2x8x8xbf16>, vector<2x8x8xf32> -> vector<2x8x8xf32>
    "tpu.trace_stop"() : () -> ()
    %cst_34 = arith.constant 0.353553385 : f32
    %103 = vector.broadcast %cst_34 : f32 to vector<2x8x8xf32>
    %104 = arith.mulf %102, %103 : vector<2x8x8xf32>
    %105 = vector.broadcast %21 : vector<2x1x8xf32> to vector<2x8x8xf32>
    %106 = arith.addf %104, %105 : vector<2x8x8xf32>
    %cst_35 = arith.constant dense<0xFF800000> : vector<2x8xf32>
    %107 = vector.multi_reduction <maximumf>, %106, %cst_35 [2] : vector<2x8x8xf32> to vector<2x8xf32>
    %108 = vector.shape_cast %107 : vector<2x8xf32> to vector<2x8x1xf32>
    %109 = vector.broadcast %108 : vector<2x8x1xf32> to vector<2x8x8xf32>
    %110 = arith.subf %106, %109 : vector<2x8x8xf32>
    %111 = math.exp %110 : vector<2x8x8xf32>
    %cst_36 = arith.constant dense<0.000000e+00> : vector<2x8xf32>
    %112 = vector.multi_reduction <add>, %111, %cst_36 [2] : vector<2x8x8xf32> to vector<2x8xf32>
    %113 = vector.shape_cast %112 : vector<2x8xf32> to vector<2x8x1xf32>
    %114 = tpu.reciprocal %113 {approx = true} : vector<2x8x1xf32> -> vector<2x8x1xf32>
    %115 = vector.broadcast %114 : vector<2x8x1xf32> to vector<2x8x8xf32>
    %116 = arith.mulf %111, %115 : vector<2x8x8xf32>
    %117 = arith.truncf %116 : vector<2x8x8xf32> to vector<2x8x8xbf16>
    %118 = vector.extract_strided_slice %20 {offsets = [0, 0, 24], sizes = [2, 8, 8], strides = [1, 1, 1]} : vector<2x8x32xbf16> to vector<2x8x8xbf16>
    "tpu.trace_start"() <{level = 10 : i32, message = "bqk,bkd->bqd"}> : () -> ()
    %cst_37 = arith.constant dense<0.000000e+00> : vector<2x8x8xf32>
    %119 = tpu.matmul %117, %118, %cst_37 {dimension_numbers = #tpu.dot_dimension_numbers<[2], [1], [1], [2], [0, 0, 0, 1, 1, 2], [0], [0]>} : vector<2x8x8xbf16>, vector<2x8x8xbf16>, vector<2x8x8xf32> -> vector<2x8x8xf32>
    "tpu.trace_stop"() : () -> ()
    %120 = vector.shape_cast %119 : vector<2x8x8xf32> to vector<16x8xf32>
    %121 = arith.truncf %120 : vector<16x8xf32> to vector<16x8xbf16>
    %122 = vector.extract_strided_slice %23 {offsets = [24, 0], sizes = [8, 32], strides = [1, 1]} : vector<32x32xbf16> to vector<8x32xbf16>
    %cst_38 = arith.constant dense<0.000000e+00> : vector<16x32xf32>
    %123 = tpu.matmul %121, %122, %cst_38 {dimension_numbers = #tpu.dot_dimension_numbers<[1], [0], [0], [1], [0, 0, 1, 1], [], []>} : vector<16x8xbf16>, vector<8x32xbf16>, vector<16x32xf32> -> vector<16x32xf32>
    %124 = arith.addf %99, %123 : vector<16x32xf32>
    %c0_39 = arith.constant 0 : index
    %c0_40 = arith.constant 0 : index
    %c0_41 = arith.constant 0 : index
    %125 = vector.load %arg9[%c0_39, %c0_40, %c0_41] : memref<1x1x32xf32, #tpu.memory_space<vmem>>, vector<1x1x32xf32>
    %126 = vector.shape_cast %125 : vector<1x1x32xf32> to vector<1x32xf32>
    %127 = vector.broadcast %126 : vector<1x32xf32> to vector<16x32xf32>
    %128 = arith.addf %124, %127 : vector<16x32xf32>
    %129 = arith.addf %3, %128 : vector<16x32xf32>
    %c0_42 = arith.constant 0 : index
    %c0_43 = arith.constant 0 : index
    %c0_44 = arith.constant 0 : index
    %130 = vector.load %arg10[%c0_42, %c0_43, %c0_44] : memref<1x1x32xf32, #tpu.memory_space<vmem>>, vector<1x1x32xf32>
    %131 = vector.shape_cast %130 : vector<1x1x32xf32> to vector<1x32xf32>
    %c0_45 = arith.constant 0 : index
    %c0_46 = arith.constant 0 : index
    %c0_47 = arith.constant 0 : index
    %132 = vector.load %arg11[%c0_45, %c0_46, %c0_47] : memref<1x1x32xf32, #tpu.memory_space<vmem>>, vector<1x1x32xf32>
    %133 = vector.shape_cast %132 : vector<1x1x32xf32> to vector<1x32xf32>
    %cst_48 = arith.constant dense<0.000000e+00> : vector<16xf32>
    %134 = vector.multi_reduction <add>, %129, %cst_48 [1] : vector<16x32xf32> to vector<16xf32>
    %135 = vector.shape_cast %134 : vector<16xf32> to vector<16x1xf32>
    %cst_49 = arith.constant 3.200000e+01 : f32
    %136 = vector.broadcast %cst_49 : f32 to vector<16x1xf32>
    %137 = arith.divf %135, %136 : vector<16x1xf32>
    %138 = vector.broadcast %137 : vector<16x1xf32> to vector<16x32xf32>
    %139 = arith.subf %129, %138 : vector<16x32xf32>
    %140 = arith.mulf %139, %139 : vector<16x32xf32>
    %cst_50 = arith.constant dense<0.000000e+00> : vector<16xf32>
    %141 = vector.multi_reduction <add>, %140, %cst_50 [1] : vector<16x32xf32> to vector<16xf32>
    %142 = vector.shape_cast %141 : vector<16xf32> to vector<16x1xf32>
    %cst_51 = arith.constant 3.200000e+01 : f32
    %143 = vector.broadcast %cst_51 : f32 to vector<16x1xf32>
    %144 = arith.divf %142, %143 : vector<16x1xf32>
    %145 = vector.broadcast %137 : vector<16x1xf32> to vector<16x32xf32>
    %146 = arith.subf %129, %145 : vector<16x32xf32>
    %cst_52 = arith.constant 9.99999974E-6 : f32
    %147 = vector.broadcast %cst_52 : f32 to vector<16x1xf32>
    %148 = arith.addf %144, %147 : vector<16x1xf32>
    %149 = math.rsqrt %148 : vector<16x1xf32>
    %150 = vector.broadcast %149 : vector<16x1xf32> to vector<16x32xf32>
    %151 = arith.mulf %146, %150 : vector<16x32xf32>
    %152 = vector.broadcast %131 : vector<1x32xf32> to vector<16x32xf32>
    %153 = arith.mulf %151, %152 : vector<16x32xf32>
    %154 = vector.broadcast %133 : vector<1x32xf32> to vector<16x32xf32>
    %155 = arith.addf %153, %154 : vector<16x32xf32>
    %156 = arith.truncf %155 : vector<16x32xf32> to vector<16x32xbf16>
    %c0_53 = arith.constant 0 : index
    %c0_54 = arith.constant 0 : index
    %c0_55 = arith.constant 0 : index
    %157 = vector.load %arg12[%c0_53, %c0_54, %c0_55] : memref<1x32x64xbf16, #tpu.memory_space<vmem>>, vector<1x32x64xbf16>
    %158 = vector.shape_cast %157 : vector<1x32x64xbf16> to vector<32x64xbf16>
    %cst_56 = arith.constant dense<0.000000e+00> : vector<16x64xf32>
    %159 = tpu.matmul %156, %158, %cst_56 {dimension_numbers = #tpu.dot_dimension_numbers<[1], [0], [0], [1], [0, 0, 1, 1], [], []>} : vector<16x32xbf16>, vector<32x64xbf16>, vector<16x64xf32> -> vector<16x64xf32>
    %c0_57 = arith.constant 0 : index
    %c0_58 = arith.constant 0 : index
    %c0_59 = arith.constant 0 : index
    %160 = vector.load %arg13[%c0_57, %c0_58, %c0_59] : memref<1x1x64xf32, #tpu.memory_space<vmem>>, vector<1x1x64xf32>
    %161 = vector.shape_cast %160 : vector<1x1x64xf32> to vector<1x64xf32>
    %162 = vector.broadcast %161 : vector<1x64xf32> to vector<16x64xf32>
    %163 = arith.addf %159, %162 : vector<16x64xf32>
    %cst_60 = arith.constant 0.000000e+00 : f32
    %164 = vector.broadcast %cst_60 : f32 to vector<16x64xf32>
    %165 = arith.maximumf %163, %164 : vector<16x64xf32>
    %166 = arith.truncf %165 : vector<16x64xf32> to vector<16x64xbf16>
    %c0_61 = arith.constant 0 : index
    %c0_62 = arith.constant 0 : index
    %c0_63 = arith.constant 0 : index
    %167 = vector.load %arg14[%c0_61, %c0_62, %c0_63] : memref<1x64x32xbf16, #tpu.memory_space<vmem>>, vector<1x64x32xbf16>
    %168 = vector.shape_cast %167 : vector<1x64x32xbf16> to vector<64x32xbf16>
    %cst_64 = arith.constant dense<0.000000e+00> : vector<16x32xf32>
    %169 = tpu.matmul %166, %168, %cst_64 {dimension_numbers = #tpu.dot_dimension_numbers<[1], [0], [0], [1], [0, 0, 1, 1], [], []>} : vector<16x64xbf16>, vector<64x32xbf16>, vector<16x32xf32> -> vector<16x32xf32>
    %c0_65 = arith.constant 0 : index
    %c0_66 = arith.constant 0 : index
    %c0_67 = arith.constant 0 : index
    %170 = vector.load %arg15[%c0_65, %c0_66, %c0_67] : memref<1x1x32xf32, #tpu.memory_space<vmem>>, vector<1x1x32xf32>
    %171 = vector.shape_cast %170 : vector<1x1x32xf32> to vector<1x32xf32>
    %172 = vector.broadcast %171 : vector<1x32xf32> to vector<16x32xf32>
    %173 = arith.addf %169, %172 : vector<16x32xf32>
    %174 = arith.addf %155, %173 : vector<16x32xf32>
    %c0_68 = arith.constant 0 : index
    %c0_69 = arith.constant 0 : index
    %c0_70 = arith.constant 0 : index
    %175 = vector.load %arg16[%c0_68, %c0_69, %c0_70] : memref<1x1x32xf32, #tpu.memory_space<vmem>>, vector<1x1x32xf32>
    %176 = vector.shape_cast %175 : vector<1x1x32xf32> to vector<1x32xf32>
    %c0_71 = arith.constant 0 : index
    %c0_72 = arith.constant 0 : index
    %c0_73 = arith.constant 0 : index
    %177 = vector.load %arg17[%c0_71, %c0_72, %c0_73] : memref<1x1x32xf32, #tpu.memory_space<vmem>>, vector<1x1x32xf32>
    %178 = vector.shape_cast %177 : vector<1x1x32xf32> to vector<1x32xf32>
    %cst_74 = arith.constant dense<0.000000e+00> : vector<16xf32>
    %179 = vector.multi_reduction <add>, %174, %cst_74 [1] : vector<16x32xf32> to vector<16xf32>
    %180 = vector.shape_cast %179 : vector<16xf32> to vector<16x1xf32>
    %cst_75 = arith.constant 3.200000e+01 : f32
    %181 = vector.broadcast %cst_75 : f32 to vector<16x1xf32>
    %182 = arith.divf %180, %181 : vector<16x1xf32>
    %183 = vector.broadcast %182 : vector<16x1xf32> to vector<16x32xf32>
    %184 = arith.subf %174, %183 : vector<16x32xf32>
    %185 = arith.mulf %184, %184 : vector<16x32xf32>
    %cst_76 = arith.constant dense<0.000000e+00> : vector<16xf32>
    %186 = vector.multi_reduction <add>, %185, %cst_76 [1] : vector<16x32xf32> to vector<16xf32>
    %187 = vector.shape_cast %186 : vector<16xf32> to vector<16x1xf32>
    %cst_77 = arith.constant 3.200000e+01 : f32
    %188 = vector.broadcast %cst_77 : f32 to vector<16x1xf32>
    %189 = arith.divf %187, %188 : vector<16x1xf32>
    %190 = vector.broadcast %182 : vector<16x1xf32> to vector<16x32xf32>
    %191 = arith.subf %174, %190 : vector<16x32xf32>
    %cst_78 = arith.constant 9.99999974E-6 : f32
    %192 = vector.broadcast %cst_78 : f32 to vector<16x1xf32>
    %193 = arith.addf %189, %192 : vector<16x1xf32>
    %194 = math.rsqrt %193 : vector<16x1xf32>
    %195 = vector.broadcast %194 : vector<16x1xf32> to vector<16x32xf32>
    %196 = arith.mulf %191, %195 : vector<16x32xf32>
    %197 = vector.broadcast %176 : vector<1x32xf32> to vector<16x32xf32>
    %198 = arith.mulf %196, %197 : vector<16x32xf32>
    %199 = vector.broadcast %178 : vector<1x32xf32> to vector<16x32xf32>
    %200 = arith.addf %198, %199 : vector<16x32xf32>
    %c1_i32 = arith.constant 1 : i32
    %201 = arith.cmpi slt, %arg0, %c1_i32 : i32
    %202 = arith.extui %201 : i1 to i32
    %c0_i32_79 = arith.constant 0 : i32
    %203 = arith.cmpi ne, %202, %c0_i32_79 : i32
    scf.if %203 {
      %c0_82 = arith.constant 0 : index
      %c0_83 = arith.constant 0 : index
      %207 = vector.load %arg19[%c0_82, %c0_83] : memref<16x32xf32, #tpu.memory_space<vmem>>, vector<16x32xf32>
      tpu.vector_store %arg19[%c0_82, %c0_83], %200 {strides = array<i32>} : memref<16x32xf32, #tpu.memory_space<vmem>>, vector<16x32xf32>,
    } else {
    }
    %c1_i32_80 = arith.constant 1 : i32
    %204 = arith.cmpi eq, %arg0, %c1_i32_80 : i32
    %205 = arith.extui %204 : i1 to i32
    %c0_i32_81 = arith.constant 0 : i32
    %206 = arith.cmpi ne, %205, %c0_i32_81 : i32
    scf.if %206 {
      %c0_82 = arith.constant 0 : index
      %c0_83 = arith.constant 0 : index
      %207 = vector.load %arg3[%c0_82, %c0_83] : memref<2x16xf32, #tpu.memory_space<vmem>>, vector<2x16xf32>
      %cst_84 = arith.constant dense<0.000000e+00> : vector<2x32xf32>
      %208 = tpu.matmul %207, %200, %cst_84 {dimension_numbers = #tpu.dot_dimension_numbers<[1], [0], [0], [1], [0, 0, 1, 1], [], []>} : vector<2x16xf32>, vector<16x32xf32>, vector<2x32xf32> -> vector<2x32xf32>
      %c0_85 = arith.constant 0 : index
      %c0_86 = arith.constant 0 : index
      %209 = vector.load %arg4[%c0_85, %c0_86] : memref<32x5xf32, #tpu.memory_space<vmem>>, vector<32x5xf32>
      %cst_87 = arith.constant dense<0.000000e+00> : vector<2x5xf32>
      %210 = tpu.matmul %208, %209, %cst_87 {dimension_numbers = #tpu.dot_dimension_numbers<[1], [0], [0], [1], [0, 0, 1, 1], [], []>} : vector<2x32xf32>, vector<32x5xf32>, vector<2x5xf32> -> vector<2x5xf32>
      %c0_88 = arith.constant 0 : index
      %c0_89 = arith.constant 0 : index
      %211 = vector.load %arg5[%c0_88, %c0_89] : memref<1x5xf32, #tpu.memory_space<vmem>>, vector<1x5xf32>
      %212 = vector.broadcast %211 : vector<1x5xf32> to vector<2x5xf32>
      %213 = arith.addf %210, %212 : vector<2x5xf32>
      %c0_90 = arith.constant 0 : index
      %c0_91 = arith.constant 0 : index
      %214 = vector.load %arg18[%c0_90, %c0_91] : memref<2x5xf32, #tpu.memory_space<vmem>>, vector<2x5xf32>
      tpu.vector_store %arg18[%c0_90, %c0_91], %213 {strides = array<i32>} : memref<2x5xf32, #tpu.memory_space<vmem>>, vector<2x5xf32>,
    } else {
    }
    return
  }
  func.func @transform_0(%arg0: i32) -> (i32, i32) {
    %c0_i32 = arith.constant 0 : i32
    %c0_i32_0 = arith.constant 0 : i32
    %c0_i32_1 = arith.constant 0 : i32
    return %c0_i32, %c0_i32_0 : i32, i32
  }
  func.func @transform_1(%arg0: i32) -> (i32, i32, i32) {
    %c0_i32 = arith.constant 0 : i32
    %c0_i32_0 = arith.constant 0 : i32
    %c0_i32_1 = arith.constant 0 : i32
    %c0_i32_2 = arith.constant 0 : i32
    return %c0_i32, %c0_i32_0, %c0_i32_1 : i32, i32, i32
  }
  func.func @transform_2(%arg0: i32) -> (i32, i32) {
    %c0_i32 = arith.constant 0 : i32
    %c0_i32_0 = arith.constant 0 : i32
    %c0_i32_1 = arith.constant 0 : i32
    return %c0_i32, %c0_i32_0 : i32, i32
  }
  func.func @transform_3(%arg0: i32) -> (i32, i32) {
    %c0_i32 = arith.constant 0 : i32
    %c0_i32_0 = arith.constant 0 : i32
    %c0_i32_1 = arith.constant 0 : i32
    return %c0_i32, %c0_i32_0 : i32, i32
  }
  func.func @transform_4(%arg0: i32) -> (i32, i32) {
    %c0_i32 = arith.constant 0 : i32
    %c0_i32_0 = arith.constant 0 : i32
    %c0_i32_1 = arith.constant 0 : i32
    return %c0_i32, %c0_i32_0 : i32, i32
  }
  func.func @transform_5(%arg0: i32) -> (i32, i32, i32) {
    %c0_i32 = arith.constant 0 : i32
    %c0_i32_0 = arith.constant 0 : i32
    %c0_i32_1 = arith.constant 0 : i32
    return %arg0, %c0_i32, %c0_i32_0 : i32, i32, i32
  }
  func.func @transform_6(%arg0: i32) -> (i32, i32, i32) {
    %c0_i32 = arith.constant 0 : i32
    %c0_i32_0 = arith.constant 0 : i32
    %c0_i32_1 = arith.constant 0 : i32
    return %arg0, %c0_i32, %c0_i32_0 : i32, i32, i32
  }
  func.func @transform_7(%arg0: i32) -> (i32, i32, i32) {
    %c0_i32 = arith.constant 0 : i32
    %c0_i32_0 = arith.constant 0 : i32
    %c0_i32_1 = arith.constant 0 : i32
    return %arg0, %c0_i32, %c0_i32_0 : i32, i32, i32
  }
  func.func @transform_8(%arg0: i32) -> (i32, i32, i32) {
    %c0_i32 = arith.constant 0 : i32
    %c0_i32_0 = arith.constant 0 : i32
    %c0_i32_1 = arith.constant 0 : i32
    return %arg0, %c0_i32, %c0_i32_0 : i32, i32, i32
  }
  func.func @transform_9(%arg0: i32) -> (i32, i32, i32) {
    %c0_i32 = arith.constant 0 : i32
    %c0_i32_0 = arith.constant 0 : i32
    %c0_i32_1 = arith.constant 0 : i32
    return %arg0, %c0_i32, %c0_i32_0 : i32, i32, i32
  }
  func.func @transform_10(%arg0: i32) -> (i32, i32, i32) {
    %c0_i32 = arith.constant 0 : i32
    %c0_i32_0 = arith.constant 0 : i32
    %c0_i32_1 = arith.constant 0 : i32
    return %arg0, %c0_i32, %c0_i32_0 : i32, i32, i32
  }
  func.func @transform_11(%arg0: i32) -> (i32, i32, i32) {
    %c0_i32 = arith.constant 0 : i32
    %c0_i32_0 = arith.constant 0 : i32
    %c0_i32_1 = arith.constant 0 : i32
    return %arg0, %c0_i32, %c0_i32_0 : i32, i32, i32
  }
  func.func @transform_12(%arg0: i32) -> (i32, i32, i32) {
    %c0_i32 = arith.constant 0 : i32
    %c0_i32_0 = arith.constant 0 : i32
    %c0_i32_1 = arith.constant 0 : i32
    return %arg0, %c0_i32, %c0_i32_0 : i32, i32, i32
  }
  func.func @transform_13(%arg0: i32) -> (i32, i32, i32) {
    %c0_i32 = arith.constant 0 : i32
    %c0_i32_0 = arith.constant 0 : i32
    %c0_i32_1 = arith.constant 0 : i32
    return %arg0, %c0_i32, %c0_i32_0 : i32, i32, i32
  }
  func.func @transform_14(%arg0: i32) -> (i32, i32, i32) {
    %c0_i32 = arith.constant 0 : i32
    %c0_i32_0 = arith.constant 0 : i32
    %c0_i32_1 = arith.constant 0 : i32
    return %arg0, %c0_i32, %c0_i32_0 : i32, i32, i32
  }
  func.func @transform_15(%arg0: i32) -> (i32, i32, i32) {
    %c0_i32 = arith.constant 0 : i32
    %c0_i32_0 = arith.constant 0 : i32
    %c0_i32_1 = arith.constant 0 : i32
    return %arg0, %c0_i32, %c0_i32_0 : i32, i32, i32
  }
  func.func @transform_16(%arg0: i32) -> (i32, i32, i32) {
    %c0_i32 = arith.constant 0 : i32
    %c0_i32_0 = arith.constant 0 : i32
    %c0_i32_1 = arith.constant 0 : i32
    return %arg0, %c0_i32, %c0_i32_0 : i32, i32, i32
  }
  func.func @transform_17(%arg0: i32) -> (i32, i32) {
    %c0_i32 = arith.constant 0 : i32
    %c0_i32_0 = arith.constant 0 : i32
    %c0_i32_1 = arith.constant 0 : i32
    return %c0_i32, %c0_i32_0 : i32, i32
  }
}

</mosaic_0001>

<llo_original>
// kernel: tpu_custom_call.1
$region0: #{tpu_custom_call.1}
  #allocation0 [shape = 'u32[]', space=smem, size = 0x4, offset = 0x4, fixed_abs, tag = 'smem constant byte address 0x4 - core index']
  #allocation1 [shape = 'u32[144,128]{1,0:T(1,128)}', space=vmem, size = 0x12000, scoped, tag = 'internal scratch']
  #allocation2 [shape = 'f32[16,32]{1,0:T(8,128)}', space=vmem, size = 0x2000, scoped, tag = 'scratch operand']
  %s0 = inlined_call_operand.vmem [shape: f32[16,32], index: 0, kind: input, shape index: {}]
  %s1 = inlined_call_operand.vmem [shape: f32[2,1,8], index: 1, kind: input, shape index: {}]
  %s2 = inlined_call_operand.vmem [shape: f32[2,16], index: 2, kind: input, shape index: {}]
  %s3 = inlined_call_operand.vmem [shape: f32[32,5], index: 3, kind: input, shape index: {}]
  %s4 = inlined_call_operand.hbm [shape: f32[1,5], index: 4, kind: input, shape index: {}]
  %s5 = inlined_call_operand.vmem [shape: bf16[2,32,96], index: 5, kind: input, shape index: {}]
  %s6 = inlined_call_operand.vmem [shape: f32[2,1,96], index: 6, kind: input, shape index: {}]
  %s7 = inlined_call_operand.vmem [shape: bf16[2,32,32], index: 7, kind: input, shape index: {}]
  %s8 = inlined_call_operand.vmem [shape: f32[2,1,32], index: 8, kind: input, shape index: {}]
  %s9 = inlined_call_operand.vmem [shape: f32[2,1,32], index: 9, kind: input, shape index: {}]
  %s10 = inlined_call_operand.vmem [shape: f32[2,1,32], index: 10, kind: input, shape index: {}]
  %s11 = inlined_call_operand.vmem [shape: bf16[2,32,64], index: 11, kind: input, shape index: {}]
  %s12 = inlined_call_operand.vmem [shape: f32[2,1,64], index: 12, kind: input, shape index: {}]
  %s13 = inlined_call_operand.vmem [shape: bf16[2,64,32], index: 13, kind: input, shape index: {}]
  %s14 = inlined_call_operand.vmem [shape: f32[2,1,32], index: 14, kind: input, shape index: {}]
  %s15 = inlined_call_operand.vmem [shape: f32[2,1,32], index: 15, kind: input, shape index: {}]
  %s16 = inlined_call_operand.vmem [shape: f32[2,1,32], index: 16, kind: input, shape index: {}]
  %s17 = inlined_call_operand.hbm [shape: f32[2,5], index: 17, kind: output, shape index: {}]
  %s18 = sld [smem:[#allocation0]]
  $region117: #{tpu_custom_call.1} parent=0
    _
  %s20 = ssub.s32 1, %s18
  %s21 = scalar_select 0, %s20, %s18
  $region1: #{tpu_custom_call.1} parent=0
    #allocation3 [shape = 'u8[512]{0}', space=vmem, size = 0x400, scoped, tag = 'input window, operand 4, single buffered']
    #allocation4 [shape = 's32[2]{0}', space=sflag, size = 0x8, scoped, tag = 'scoped memory for tpu_custom_call.1']
    #allocation5 [shape = 's32[2]{0}', space=sflag, size = 0x8, scoped, tag = 'scoped memory for tpu_custom_call.1']
    #allocation6 [shape = 'u8[1024]{0}', space=vmem, size = 0x400, scoped, tag = 'output window, operand 0, single buffered']
    %22 = vsyncpa [#allocation4], 0
    %23 = vsyncpa [#allocation5], 0
    loop: start=0, step=1, limit=4
    $region2: #{tpu_custom_call.1} parent=1 // loop_pre_header
      _
    $region3: #{tpu_custom_call.1} parent=1 // loop_header
      %s25 = sphi 0, %s29
      %p26 = scmp.ge.s32.totalorder %s25, 4
      %s33 = sphi 0, %s33
      %s35 = sphi 0, %s33
      %s36 = sphi 0, %s35
      %s50 = sphi 0, %s36
      %s54 = sphi 0, %s54
      %s56 = sphi 0, %s54
      %s57 = sphi 0, %s56
      %s71 = sphi 0, %s57
      %s75 = sphi 0, %s75
      %s77 = sphi 0, %s75
      %s78 = sphi 0, %s77
      %s92 = sphi 0, %s78
      %s96 = sphi 0, %s96
      %s98 = sphi 0, %s96
      %s99 = sphi 0, %s98
      %s113 = sphi 0, %s99
      %s117 = sphi 0, %s117
      %s119 = sphi 0, %s117
      %s120 = sphi 0, %s119
      %s134 = sphi 0, %s120
      %s140 = sphi 0, %s142
      %s143 = sphi 0, %s140
      %s144 = sphi 0, %s143
      %s160 = sphi 0, %s144
      %s166 = sphi 0, %s168
      %s169 = sphi 0, %s166
      %s170 = sphi 0, %s169
      %s186 = sphi 0, %s170
      %s192 = sphi 0, %s194
      %s195 = sphi 0, %s192
      %s196 = sphi 0, %s195
      %s212 = sphi 0, %s196
      %s218 = sphi 0, %s220
      %s221 = sphi 0, %s218
      %s222 = sphi 0, %s221
      %s238 = sphi 0, %s222
      %s244 = sphi 0, %s246
      %s247 = sphi 0, %s244
      %s248 = sphi 0, %s247
      %s264 = sphi 0, %s248
      %s270 = sphi 0, %s272
      %s273 = sphi 0, %s270
      %s274 = sphi 0, %s273
      %s290 = sphi 0, %s274
      %s296 = sphi 0, %s298
      %s299 = sphi 0, %s296
      %s300 = sphi 0, %s299
      %s316 = sphi 0, %s300
      %s322 = sphi 0, %s324
      %s325 = sphi 0, %s322
      %s326 = sphi 0, %s325
      %s342 = sphi 0, %s326
      %s348 = sphi 0, %s350
      %s351 = sphi 0, %s348
      %s352 = sphi 0, %s351
      %s368 = sphi 0, %s352
      %s374 = sphi 0, %s376
      %s377 = sphi 0, %s374
      %s378 = sphi 0, %s377
      %s394 = sphi 0, %s378
      %s400 = sphi 0, %s402
      %s403 = sphi 0, %s400
      %s404 = sphi 0, %s403
      %s420 = sphi 0, %s404
      %s426 = sphi 0, %s428
      %s429 = sphi 0, %s426
      %s430 = sphi 0, %s429
      %s446 = sphi 0, %s430
      %s450 = sphi 0, %s450
      %s452 = sphi 0, %s450
      %s453 = sphi 0, %s452
      %s467 = sphi 0, %s453
    $region4: #{tpu_custom_call.1} parent=1 // loop_header_branch
      %28 = sbr.rel (%p26) target = $region8
    $region5: #{tpu_custom_call.1} parent=1 // loop_body
      %s30 = ssub.s32 %s25, 1
      %s31 = ssub.s32 %s25, 2
      %s32 = sadd.s32 %s25, 1
      %s34 = sadd.s32 %s33, 1
      %p37 = scmp.eq.s32.totalorder %s25, 1
      %p38 = scmp.ne.s32.totalorder %s33, %s35
      %p39 = scmp.eq.s32.totalorder %s25, 0
      %p40 = por %p38, %p39
      %p41 = scmp.ne.s32.totalorder %s33, %s35
      %p42 = scmp.eq.s32.totalorder %s30, 1
      %p43 = por %p41, %p42
      %p44 = scmp.ne.s32.totalorder %s35, %s36
      %p45 = scmp.eq.s32.totalorder %s30, 0
      %p46 = por %p44, %p45
      %p47 = scmp.ne.s32.totalorder %s35, %s36
      %p48 = scmp.eq.s32.totalorder %s31, 1
      %p49 = por %p47, %p48
      %p51 = scmp.ne.s32.totalorder %s36, %s50
      %p52 = scmp.eq.s32.totalorder %s31, 0
      %p53 = por %p51, %p52
      %s55 = sadd.s32 %s54, 1
      %p58 = scmp.eq.s32.totalorder %s25, 1
      %p59 = scmp.ne.s32.totalorder %s54, %s56
      %p60 = scmp.eq.s32.totalorder %s25, 0
      %p61 = por %p59, %p60
      %p62 = scmp.ne.s32.totalorder %s54, %s56
      %p63 = scmp.eq.s32.totalorder %s30, 1
      %p64 = por %p62, %p63
      %p65 = scmp.ne.s32.totalorder %s56, %s57
      %p66 = scmp.eq.s32.totalorder %s30, 0
      %p67 = por %p65, %p66
      %p68 = scmp.ne.s32.totalorder %s56, %s57
      %p69 = scmp.eq.s32.totalorder %s31, 1
      %p70 = por %p68, %p69
      %p72 = scmp.ne.s32.totalorder %s57, %s71
      %p73 = scmp.eq.s32.totalorder %s31, 0
      %p74 = por %p72, %p73
      %s76 = sadd.s32 %s75, 1
      %p79 = scmp.eq.s32.totalorder %s25, 1
      %p80 = scmp.ne.s32.totalorder %s75, %s77
      %p81 = scmp.eq.s32.totalorder %s25, 0
      %p82 = por %p80, %p81
      %p83 = scmp.ne.s32.totalorder %s75, %s77
      %p84 = scmp.eq.s32.totalorder %s30, 1
      %p85 = por %p83, %p84
      %p86 = scmp.ne.s32.totalorder %s77, %s78
      %p87 = scmp.eq.s32.totalorder %s30, 0
      %p88 = por %p86, %p87
      %p89 = scmp.ne.s32.totalorder %s77, %s78
      %p90 = scmp.eq.s32.totalorder %s31, 1
      %p91 = por %p89, %p90
      %p93 = scmp.ne.s32.totalorder %s78, %s92
      %p94 = scmp.eq.s32.totalorder %s31, 0
      %p95 = por %p93, %p94
      %s97 = sadd.s32 %s96, 1
      %p100 = scmp.eq.s32.totalorder %s25, 1
      %p101 = scmp.ne.s32.totalorder %s96, %s98
      %p102 = scmp.eq.s32.totalorder %s25, 0
      %p103 = por %p101, %p102
      %p104 = scmp.ne.s32.totalorder %s96, %s98
      %p105 = scmp.eq.s32.totalorder %s30, 1
      %p106 = por %p104, %p105
      %p107 = scmp.ne.s32.totalorder %s98, %s99
      %p108 = scmp.eq.s32.totalorder %s30, 0
      %p109 = por %p107, %p108
      %p110 = scmp.ne.s32.totalorder %s98, %s99
      %p111 = scmp.eq.s32.totalorder %s31, 1
      %p112 = por %p110, %p111
      %p114 = scmp.ne.s32.totalorder %s99, %s113
      %p115 = scmp.eq.s32.totalorder %s31, 0
      %p116 = por %p114, %p115
      %s118 = sadd.s32 %s117, 1
      %p121 = scmp.eq.s32.totalorder %s25, 1
      %p122 = scmp.ne.s32.totalorder %s117, %s119
      %p123 = scmp.eq.s32.totalorder %s25, 0
      %p124 = por %p122, %p123
      %p125 = scmp.ne.s32.totalorder %s117, %s119
      %p126 = scmp.eq.s32.totalorder %s30, 1
      %p127 = por %p125, %p126
      %p128 = scmp.ne.s32.totalorder %s119, %s120
      %p129 = scmp.eq.s32.totalorder %s30, 0
      %p130 = por %p128, %p129
      %p131 = scmp.ne.s32.totalorder %s119, %s120
      %p132 = scmp.eq.s32.totalorder %s31, 1
      %p133 = por %p131, %p132
      %p135 = scmp.ne.s32.totalorder %s120, %s134
      %p136 = scmp.eq.s32.totalorder %s31, 0
      %p137 = por %p135, %p136
      %s138 = ssub.s32 %s25, %s32
      %p139 = scmp.eq.s32.totalorder %s138, 0
      %s141 = sadd.s32 %s140, 1
      %s142 = scalar_select %p139, %s140, %s141
      %p145 = pneg %p139
      %p146 = scmp.eq.s32.totalorder %s25, 1
      %p147 = por %p145, %p146
      %p148 = scmp.ne.s32.totalorder %s140, %s143
      %p149 = scmp.eq.s32.totalorder %s25, 0
      %p150 = por %p148, %p149
      %p151 = scmp.ne.s32.totalorder %s140, %s143
      %p152 = scmp.eq.s32.totalorder %s30, 1
      %p153 = por %p151, %p152
      %p154 = scmp.ne.s32.totalorder %s143, %s144
      %p155 = scmp.eq.s32.totalorder %s30, 0
      %p156 = por %p154, %p155
      %p157 = scmp.ne.s32.totalorder %s143, %s144
      %p158 = scmp.eq.s32.totalorder %s31, 1
      %p159 = por %p157, %p158
      %p161 = scmp.ne.s32.totalorder %s144, %s160
      %p162 = scmp.eq.s32.totalorder %s31, 0
      %p163 = por %p161, %p162
      %s164 = ssub.s32 %s25, %s32
      %p165 = scmp.eq.s32.totalorder %s164, 0
      %s167 = sadd.s32 %s166, 1
      %s168 = scalar_select %p165, %s166, %s167
      %p171 = pneg %p165
      %p172 = scmp.eq.s32.totalorder %s25, 1
      %p173 = por %p171, %p172
      %p174 = scmp.ne.s32.totalorder %s166, %s169
      %p175 = scmp.eq.s32.totalorder %s25, 0
      %p176 = por %p174, %p175
      %p177 = scmp.ne.s32.totalorder %s166, %s169
      %p178 = scmp.eq.s32.totalorder %s30, 1
      %p179 = por %p177, %p178
      %p180 = scmp.ne.s32.totalorder %s169, %s170
      %p181 = scmp.eq.s32.totalorder %s30, 0
      %p182 = por %p180, %p181
      %p183 = scmp.ne.s32.totalorder %s169, %s170
      %p184 = scmp.eq.s32.totalorder %s31, 1
      %p185 = por %p183, %p184
      %p187 = scmp.ne.s32.totalorder %s170, %s186
      %p188 = scmp.eq.s32.totalorder %s31, 0
      %p189 = por %p187, %p188
      %s190 = ssub.s32 %s25, %s32
      %p191 = scmp.eq.s32.totalorder %s190, 0
      %s193 = sadd.s32 %s192, 1
      %s194 = scalar_select %p191, %s192, %s193
      %p197 = pneg %p191
      %p198 = scmp.eq.s32.totalorder %s25, 1
      %p199 = por %p197, %p198
      %p200 = scmp.ne.s32.totalorder %s192, %s195
      %p201 = scmp.eq.s32.totalorder %s25, 0
      %p202 = por %p200, %p201
      %p203 = scmp.ne.s32.totalorder %s192, %s195
      %p204 = scmp.eq.s32.totalorder %s30, 1
      %p205 = por %p203, %p204
      %p206 = scmp.ne.s32.totalorder %s195, %s196
      %p207 = scmp.eq.s32.totalorder %s30, 0
      %p208 = por %p206, %p207
      %p209 = scmp.ne.s32.totalorder %s195, %s196
      %p210 = scmp.eq.s32.totalorder %s31, 1
      %p211 = por %p209, %p210
      %p213 = scmp.ne.s32.totalorder %s196, %s212
      %p214 = scmp.eq.s32.totalorder %s31, 0
      %p215 = por %p213, %p214
      %s216 = ssub.s32 %s25, %s32
      %p217 = scmp.eq.s32.totalorder %s216, 0
      %s219 = sadd.s32 %s218, 1
      %s220 = scalar_select %p217, %s218, %s219
      %p223 = pneg %p217
      %p224 = scmp.eq.s32.totalorder %s25, 1
      %p225 = por %p223, %p224
      %p226 = scmp.ne.s32.totalorder %s218, %s221
      %p227 = scmp.eq.s32.totalorder %s25, 0
      %p228 = por %p226, %p227
      %p229 = scmp.ne.s32.totalorder %s218, %s221
      %p230 = scmp.eq.s32.totalorder %s30, 1
      %p231 = por %p229, %p230
      %p232 = scmp.ne.s32.totalorder %s221, %s222
      %p233 = scmp.eq.s32.totalorder %s30, 0
      %p234 = por %p232, %p233
      %p235 = scmp.ne.s32.totalorder %s221, %s222
      %p236 = scmp.eq.s32.totalorder %s31, 1
      %p237 = por %p235, %p236
      %p239 = scmp.ne.s32.totalorder %s222, %s238
      %p240 = scmp.eq.s32.totalorder %s31, 0
      %p241 = por %p239, %p240
      %s242 = ssub.s32 %s25, %s32
      %p243 = scmp.eq.s32.totalorder %s242, 0
      %s245 = sadd.s32 %s244, 1
      %s246 = scalar_select %p243, %s244, %s245
      %p249 = pneg %p243
      %p250 = scmp.eq.s32.totalorder %s25, 1
      %p251 = por %p249, %p250
      %p252 = scmp.ne.s32.totalorder %s244, %s247
      %p253 = scmp.eq.s32.totalorder %s25, 0
      %p254 = por %p252, %p253
      %p255 = scmp.ne.s32.totalorder %s244, %s247
      %p256 = scmp.eq.s32.totalorder %s30, 1
      %p257 = por %p255, %p256
      %p258 = scmp.ne.s32.totalorder %s247, %s248
      %p259 = scmp.eq.s32.totalorder %s30, 0
      %p260 = por %p258, %p259
      %p261 = scmp.ne.s32.totalorder %s247, %s248
      %p262 = scmp.eq.s32.totalorder %s31, 1
      %p263 = por %p261, %p262
      %p265 = scmp.ne.s32.totalorder %s248, %s264
      %p266 = scmp.eq.s32.totalorder %s31, 0
      %p267 = por %p265, %p266
      %s268 = ssub.s32 %s25, %s32
      %p269 = scmp.eq.s32.totalorder %s268, 0
      %s271 = sadd.s32 %s270, 1
      %s272 = scalar_select %p269, %s270, %s271
      %p275 = pneg %p269
      %p276 = scmp.eq.s32.totalorder %s25, 1
      %p277 = por %p275, %p276
      %p278 = scmp.ne.s32.totalorder %s270, %s273
      %p279 = scmp.eq.s32.totalorder %s25, 0
      %p280 = por %p278, %p279
      %p281 = scmp.ne.s32.totalorder %s270, %s273
      %p282 = scmp.eq.s32.totalorder %s30, 1
      %p283 = por %p281, %p282
      %p284 = scmp.ne.s32.totalorder %s273, %s274
      %p285 = scmp.eq.s32.totalorder %s30, 0
      %p286 = por %p284, %p285
      %p287 = scmp.ne.s32.totalorder %s273, %s274
      %p288 = scmp.eq.s32.totalorder %s31, 1
      %p289 = por %p287, %p288
      %p291 = scmp.ne.s32.totalorder %s274, %s290
      %p292 = scmp.eq.s32.totalorder %s31, 0
      %p293 = por %p291, %p292
      %s294 = ssub.s32 %s25, %s32
      %p295 = scmp.eq.s32.totalorder %s294, 0
      %s297 = sadd.s32 %s296, 1
      %s298 = scalar_select %p295, %s296, %s297
      %p301 = pneg %p295
      %p302 = scmp.eq.s32.totalorder %s25, 1
      %p303 = por %p301, %p302
      %p304 = scmp.ne.s32.totalorder %s296, %s299
      %p305 = scmp.eq.s32.totalorder %s25, 0
      %p306 = por %p304, %p305
      %p307 = scmp.ne.s32.totalorder %s296, %s299
      %p308 = scmp.eq.s32.totalorder %s30, 1
      %p309 = por %p307, %p308
      %p310 = scmp.ne.s32.totalorder %s299, %s300
      %p311 = scmp.eq.s32.totalorder %s30, 0
      %p312 = por %p310, %p311
      %p313 = scmp.ne.s32.totalorder %s299, %s300
      %p314 = scmp.eq.s32.totalorder %s31, 1
      %p315 = por %p313, %p314
      %p317 = scmp.ne.s32.totalorder %s300, %s316
      %p318 = scmp.eq.s32.totalorder %s31, 0
      %p319 = por %p317, %p318
      %s320 = ssub.s32 %s25, %s32
      %p321 = scmp.eq.s32.totalorder %s320, 0
      %s323 = sadd.s32 %s322, 1
      %s324 = scalar_select %p321, %s322, %s323
      %p327 = pneg %p321
      %p328 = scmp.eq.s32.totalorder %s25, 1
      %p329 = por %p327, %p328
      %p330 = scmp.ne.s32.totalorder %s322, %s325
      %p331 = scmp.eq.s32.totalorder %s25, 0
      %p332 = por %p330, %p331
      %p333 = scmp.ne.s32.totalorder %s322, %s325
      %p334 = scmp.eq.s32.totalorder %s30, 1
      %p335 = por %p333, %p334
      %p336 = scmp.ne.s32.totalorder %s325, %s326
      %p337 = scmp.eq.s32.totalorder %s30, 0
      %p338 = por %p336, %p337
      %p339 = scmp.ne.s32.totalorder %s325, %s326
      %p340 = scmp.eq.s32.totalorder %s31, 1
      %p341 = por %p339, %p340
      %p343 = scmp.ne.s32.totalorder %s326, %s342
      %p344 = scmp.eq.s32.totalorder %s31, 0
      %p345 = por %p343, %p344
      %s346 = ssub.s32 %s25, %s32
      %p347 = scmp.eq.s32.totalorder %s346, 0
      %s349 = sadd.s32 %s348, 1
      %s350 = scalar_select %p347, %s348, %s349
      %p353 = pneg %p347
      %p354 = scmp.eq.s32.totalorder %s25, 1
      %p355 = por %p353, %p354
      %p356 = scmp.ne.s32.totalorder %s348, %s351
      %p357 = scmp.eq.s32.totalorder %s25, 0
      %p358 = por %p356, %p357
      %p359 = scmp.ne.s32.totalorder %s348, %s351
      %p360 = scmp.eq.s32.totalorder %s30, 1
      %p361 = por %p359, %p360
      %p362 = scmp.ne.s32.totalorder %s351, %s352
      %p363 = scmp.eq.s32.totalorder %s30, 0
      %p364 = por %p362, %p363
      %p365 = scmp.ne.s32.totalorder %s351, %s352
      %p366 = scmp.eq.s32.totalorder %s31, 1
      %p367 = por %p365, %p366
      %p369 = scmp.ne.s32.totalorder %s352, %s368
      %p370 = scmp.eq.s32.totalorder %s31, 0
      %p371 = por %p369, %p370
      %s372 = ssub.s32 %s25, %s32
      %p373 = scmp.eq.s32.totalorder %s372, 0
      %s375 = sadd.s32 %s374, 1
      %s376 = scalar_select %p373, %s374, %s375
      %p379 = pneg %p373
      %p380 = scmp.eq.s32.totalorder %s25, 1
      %p381 = por %p379, %p380
      %p382 = scmp.ne.s32.totalorder %s374, %s377
      %p383 = scmp.eq.s32.totalorder %s25, 0
      %p384 = por %p382, %p383
      %p385 = scmp.ne.s32.totalorder %s374, %s377
      %p386 = scmp.eq.s32.totalorder %s30, 1
      %p387 = por %p385, %p386
      %p388 = scmp.ne.s32.totalorder %s377, %s378
      %p389 = scmp.eq.s32.totalorder %s30, 0
      %p390 = por %p388, %p389
      %p391 = scmp.ne.s32.totalorder %s377, %s378
      %p392 = scmp.eq.s32.totalorder %s31, 1
      %p393 = por %p391, %p392
      %p395 = scmp.ne.s32.totalorder %s378, %s394
      %p396 = scmp.eq.s32.totalorder %s31, 0
      %p397 = por %p395, %p396
      %s398 = ssub.s32 %s25, %s32
      %p399 = scmp.eq.s32.totalorder %s398, 0
      %s401 = sadd.s32 %s400, 1
      %s402 = scalar_select %p399, %s400, %s401
      %p405 = pneg %p399
      %p406 = scmp.eq.s32.totalorder %s25, 1
      %p407 = por %p405, %p406
      %p408 = scmp.ne.s32.totalorder %s400, %s403
      %p409 = scmp.eq.s32.totalorder %s25, 0
      %p410 = por %p408, %p409
      %p411 = scmp.ne.s32.totalorder %s400, %s403
      %p412 = scmp.eq.s32.totalorder %s30, 1
      %p413 = por %p411, %p412
      %p414 = scmp.ne.s32.totalorder %s403, %s404
      %p415 = scmp.eq.s32.totalorder %s30, 0
      %p416 = por %p414, %p415
      %p417 = scmp.ne.s32.totalorder %s403, %s404
      %p418 = scmp.eq.s32.totalorder %s31, 1
      %p419 = por %p417, %p418
      %p421 = scmp.ne.s32.totalorder %s404, %s420
      %p422 = scmp.eq.s32.totalorder %s31, 0
      %p423 = por %p421, %p422
      %s424 = ssub.s32 %s25, %s32
      %p425 = scmp.eq.s32.totalorder %s424, 0
      %s427 = sadd.s32 %s426, 1
      %s428 = scalar_select %p425, %s426, %s427
      %p431 = pneg %p425
      %p432 = scmp.eq.s32.totalorder %s25, 1
      %p433 = por %p431, %p432
      %p434 = scmp.ne.s32.totalorder %s426, %s429
      %p435 = scmp.eq.s32.totalorder %s25, 0
      %p436 = por %p434, %p435
      %p437 = scmp.ne.s32.totalorder %s426, %s429
      %p438 = scmp.eq.s32.totalorder %s30, 1
      %p439 = por %p437, %p438
      %p440 = scmp.ne.s32.totalorder %s429, %s430
      %p441 = scmp.eq.s32.totalorder %s30, 0
      %p442 = por %p440, %p441
      %p443 = scmp.ne.s32.totalorder %s429, %s430
      %p444 = scmp.eq.s32.totalorder %s31, 1
      %p445 = por %p443, %p444
      %p447 = scmp.ne.s32.totalorder %s430, %s446
      %p448 = scmp.eq.s32.totalorder %s31, 0
      %p449 = por %p447, %p448
      %s451 = sadd.s32 %s450, 1
      %p454 = scmp.eq.s32.totalorder %s25, 1
      %p455 = scmp.ne.s32.totalorder %s450, %s452
      %p456 = scmp.eq.s32.totalorder %s25, 0
      %p457 = por %p455, %p456
      %p458 = scmp.ne.s32.totalorder %s450, %s452
      %p459 = scmp.eq.s32.totalorder %s30, 1
      %p460 = por %p458, %p459
      %p461 = scmp.ne.s32.totalorder %s452, %s453
      %p462 = scmp.eq.s32.totalorder %s30, 0
      %p463 = por %p461, %p462
      %p464 = scmp.ne.s32.totalorder %s452, %s453
      %p465 = scmp.eq.s32.totalorder %s31, 1
      %p466 = por %p464, %p465
      %p468 = scmp.ne.s32.totalorder %s453, %s467
      %p469 = scmp.eq.s32.totalorder %s31, 0
      %p470 = por %p468, %p469
      %p471 = scmp.le.s32.totalorder 1, %s25
      %p472 = scmp.lt.s32.totalorder %s25, 3
      %p473 = pnand %p471, %p472
      %p474 = pneg %p473
      // Predicated region
      $region9: #{tpu_custom_call.1} parent=5 // pred_check
        _
      $region10: #{tpu_custom_call.1} parent=5 // pred_check_branch
        %476 = sbr.rel (%p473) target = $region12
      $region11: #{tpu_custom_call.1} parent=5 // pred_region
        %s477 = ssub.s32 %s25, 1
        // Predicated region
        $region13: #{tpu_custom_call.1} parent=11 // pred_check
          %p478 = pneg %p46
        $region14: #{tpu_custom_call.1} parent=11 // pred_check_branch
          %480 = sbr.rel (%p478) target = $region16
        $region15: #{tpu_custom_call.1} parent=11 // pred_region
          _
        $region16: #{tpu_custom_call.1} parent=11 // pred_fallthru
          _
        // Predicated region
        $region17: #{tpu_custom_call.1} parent=11 // pred_check
          %p481 = pneg %p67
        $region18: #{tpu_custom_call.1} parent=11 // pred_check_branch
          %483 = sbr.rel (%p481) target = $region20
        $region19: #{tpu_custom_call.1} parent=11 // pred_region
          _
        $region20: #{tpu_custom_call.1} parent=11 // pred_fallthru
          _
        // Predicated region
        $region21: #{tpu_custom_call.1} parent=11 // pred_check
          %p484 = pneg %p88
        $region22: #{tpu_custom_call.1} parent=11 // pred_check_branch
          %486 = sbr.rel (%p484) target = $region24
        $region23: #{tpu_custom_call.1} parent=11 // pred_region
          _
        $region24: #{tpu_custom_call.1} parent=11 // pred_fallthru
          _
        // Predicated region
        $region25: #{tpu_custom_call.1} parent=11 // pred_check
          %p487 = pneg %p109
        $region26: #{tpu_custom_call.1} parent=11 // pred_check_branch
          %489 = sbr.rel (%p487) target = $region28
        $region27: #{tpu_custom_call.1} parent=11 // pred_region
          _
        $region28: #{tpu_custom_call.1} parent=11 // pred_fallthru
          _
        // Predicated region
        $region29: #{tpu_custom_call.1} parent=11 // pred_check
          %p490 = pneg %p130
        $region30: #{tpu_custom_call.1} parent=11 // pred_check_branch
          %492 = sbr.rel (%p490) target = $region32
        $region31: #{tpu_custom_call.1} parent=11 // pred_region
          %s494 = ssub.s32 16, 16
          %495 = vsyncadd [#allocation4], %s494
          %s497 = sshll.u32 [#allocation3], 4
          %s498 = int_to_ptr.vmem [resolvable:$true] %s497
          %500 = dma.hbm_to_vmem [thread:$0]  %s4, 16, %s498, [#allocation4]
        $region32: #{tpu_custom_call.1} parent=11 // pred_fallthru
          _
      $region12: #{tpu_custom_call.1} parent=5 // pred_fallthru
        _
      %p501 = scmp.lt.s32.totalorder %s25, 2
      // Predicated region
      $region33: #{tpu_custom_call.1} parent=5 // pred_check
        %p502 = pneg %p501
      $region34: #{tpu_custom_call.1} parent=5 // pred_check_branch
        %504 = sbr.rel (%p502) target = $region36
      $region35: #{tpu_custom_call.1} parent=5 // pred_region
        // Predicated region
        $region37: #{tpu_custom_call.1} parent=35 // pred_check
          %p505 = pneg %p150
        $region38: #{tpu_custom_call.1} parent=35 // pred_check_branch
          %507 = sbr.rel (%p505) target = $region40
        $region39: #{tpu_custom_call.1} parent=35 // pred_region
          %p508 = scmp.lt.s32.totalorder %s25, 1
          %s509 = scalar_select %p508, %s25, 1
          %s510 = smul.addr %s509, 4
          %s511 = smul.addr %s510, 4
          %s512 = scalar_lea.vmem %s5, %s511
        $region40: #{tpu_custom_call.1} parent=35 // pred_fallthru
          _
        // Predicated region
        $region41: #{tpu_custom_call.1} parent=35 // pred_check
          %p513 = pneg %p176
        $region42: #{tpu_custom_call.1} parent=35 // pred_check_branch
          %515 = sbr.rel (%p513) target = $region44
        $region43: #{tpu_custom_call.1} parent=35 // pred_region
          %p516 = scmp.lt.s32.totalorder %s25, 1
          %s517 = scalar_select %p516, %s25, 1
          %s518 = scalar_lea.vmem %s6, %s517
        $region44: #{tpu_custom_call.1} parent=35 // pred_fallthru
          _
        // Predicated region
        $region45: #{tpu_custom_call.1} parent=35 // pred_check
          %p519 = pneg %p202
        $region46: #{tpu_custom_call.1} parent=35 // pred_check_branch
          %521 = sbr.rel (%p519) target = $region48
        $region47: #{tpu_custom_call.1} parent=35 // pred_region
          %p522 = scmp.lt.s32.totalorder %s25, 1
          %s523 = scalar_select %p522, %s25, 1
          %s524 = smul.addr %s523, 4
          %s525 = smul.addr %s524, 4
          %s526 = scalar_lea.vmem %s7, %s525
        $region48: #{tpu_custom_call.1} parent=35 // pred_fallthru
          _
        // Predicated region
        $region49: #{tpu_custom_call.1} parent=35 // pred_check
          %p527 = pneg %p228
        $region50: #{tpu_custom_call.1} parent=35 // pred_check_branch
          %529 = sbr.rel (%p527) target = $region52
        $region51: #{tpu_custom_call.1} parent=35 // pred_region
          %p530 = scmp.lt.s32.totalorder %s25, 1
          %s531 = scalar_select %p530, %s25, 1
          %s532 = scalar_lea.vmem %s8, %s531
        $region52: #{tpu_custom_call.1} parent=35 // pred_fallthru
          _
        // Predicated region
        $region53: #{tpu_custom_call.1} parent=35 // pred_check
          %p533 = pneg %p254
        $region54: #{tpu_custom_call.1} parent=35 // pred_check_branch
          %535 = sbr.rel (%p533) target = $region56
        $region55: #{tpu_custom_call.1} parent=35 // pred_region
          %p536 = scmp.lt.s32.totalorder %s25, 1
          %s537 = scalar_select %p536, %s25, 1
          %s538 = scalar_lea.vmem %s9, %s537
        $region56: #{tpu_custom_call.1} parent=35 // pred_fallthru
          _
        // Predicated region
        $region57: #{tpu_custom_call.1} parent=35 // pred_check
          %p539 = pneg %p280
        $region58: #{tpu_custom_call.1} parent=35 // pred_check_branch
          %541 = sbr.rel (%p539) target = $region60
        $region59: #{tpu_custom_call.1} parent=35 // pred_region
          %p542 = scmp.lt.s32.totalorder %s25, 1
          %s543 = scalar_select %p542, %s25, 1
          %s544 = scalar_lea.vmem %s10, %s543
        $region60: #{tpu_custom_call.1} parent=35 // pred_fallthru
          _
        // Predicated region
        $region61: #{tpu_custom_call.1} parent=35 // pred_check
          %p545 = pneg %p306
        $region62: #{tpu_custom_call.1} parent=35 // pred_check_branch
          %547 = sbr.rel (%p545) target = $region64
        $region63: #{tpu_custom_call.1} parent=35 // pred_region
          %p548 = scmp.lt.s32.totalorder %s25, 1
          %s549 = scalar_select %p548, %s25, 1
          %s550 = smul.addr %s549, 4
          %s551 = smul.addr %s550, 4
          %s552 = scalar_lea.vmem %s11, %s551
        $region64: #{tpu_custom_call.1} parent=35 // pred_fallthru
          _
        // Predicated region
        $region65: #{tpu_custom_call.1} parent=35 // pred_check
          %p553 = pneg %p332
        $region66: #{tpu_custom_call.1} parent=35 // pred_check_branch
          %555 = sbr.rel (%p553) target = $region68
        $region67: #{tpu_custom_call.1} parent=35 // pred_region
          %p556 = scmp.lt.s32.totalorder %s25, 1
          %s557 = scalar_select %p556, %s25, 1
          %s558 = scalar_lea.vmem %s12, %s557
        $region68: #{tpu_custom_call.1} parent=35 // pred_fallthru
          _
        // Predicated region
        $region69: #{tpu_custom_call.1} parent=35 // pred_check
          %p559 = pneg %p358
        $region70: #{tpu_custom_call.1} parent=35 // pred_check_branch
          %561 = sbr.rel (%p559) target = $region72
        $region71: #{tpu_custom_call.1} parent=35 // pred_region
          %p562 = scmp.lt.s32.totalorder %s25, 1
          %s563 = scalar_select %p562, %s25, 1
          %s564 = smul.addr %s563, 8
          %s565 = smul.addr %s564, 4
          %s566 = scalar_lea.vmem %s13, %s565
        $region72: #{tpu_custom_call.1} parent=35 // pred_fallthru
          _
        // Predicated region
        $region73: #{tpu_custom_call.1} parent=35 // pred_check
          %p567 = pneg %p384
        $region74: #{tpu_custom_call.1} parent=35 // pred_check_branch
          %569 = sbr.rel (%p567) target = $region76
        $region75: #{tpu_custom_call.1} parent=35 // pred_region
          %p570 = scmp.lt.s32.totalorder %s25, 1
          %s571 = scalar_select %p570, %s25, 1
          %s572 = scalar_lea.vmem %s14, %s571
        $region76: #{tpu_custom_call.1} parent=35 // pred_fallthru
          _
        // Predicated region
        $region77: #{tpu_custom_call.1} parent=35 // pred_check
          %p573 = pneg %p410
        $region78: #{tpu_custom_call.1} parent=35 // pred_check_branch
          %575 = sbr.rel (%p573) target = $region80
        $region79: #{tpu_custom_call.1} parent=35 // pred_region
          %p576 = scmp.lt.s32.totalorder %s25, 1
          %s577 = scalar_select %p576, %s25, 1
          %s578 = scalar_lea.vmem %s15, %s577
        $region80: #{tpu_custom_call.1} parent=35 // pred_fallthru
          _
        // Predicated region
        $region81: #{tpu_custom_call.1} parent=35 // pred_check
          %p579 = pneg %p436
        $region82: #{tpu_custom_call.1} parent=35 // pred_check_branch
          %581 = sbr.rel (%p579) target = $region84
        $region83: #{tpu_custom_call.1} parent=35 // pred_region
          %p582 = scmp.lt.s32.totalorder %s25, 1
          %s583 = scalar_select %p582, %s25, 1
          %s584 = scalar_lea.vmem %s16, %s583
        $region84: #{tpu_custom_call.1} parent=35 // pred_fallthru
          _
      $region36: #{tpu_custom_call.1} parent=5 // pred_fallthru
        _
      %p585 = scmp.le.s32.totalorder 1, %s25
      %p586 = scmp.lt.s32.totalorder %s25, 3
      %p587 = pnand %p585, %p586
      %p588 = pneg %p587
      // Predicated region
      $region85: #{tpu_custom_call.1} parent=5 // pred_check
        _
      $region86: #{tpu_custom_call.1} parent=5 // pred_check_branch
        %590 = sbr.rel (%p587) target = $region88
      $region87: #{tpu_custom_call.1} parent=5 // pred_region
        %s591 = ssub.s32 %s25, 1
        // Predicated region
        $region89: #{tpu_custom_call.1} parent=87 // pred_check
          %p592 = pneg %p130
        $region90: #{tpu_custom_call.1} parent=87 // pred_check_branch
          %594 = sbr.rel (%p592) target = $region92
        $region91: #{tpu_custom_call.1} parent=87 // pred_region
          %595 = dma.done [#allocation4], 16
        $region92: #{tpu_custom_call.1} parent=87 // pred_fallthru
          _
        %p596 = pneg %p46
        %p597 = pneg %p43
        %p598 = pneg %p67
        %p599 = pneg %p64
        %p600 = pneg %p88
        %p601 = pneg %p85
        %p602 = pneg %p109
        %p603 = pneg %p106
        %p604 = pneg %p130
        %p605 = pneg %p127
        %p606 = scmp.lt.s32.totalorder %s30, 1
        %s607 = scalar_select %p606, %s30, 1
        %s608 = smul.addr %s607, 4
        %s609 = smul.addr %s608, 4
        %s610 = scalar_lea.vmem %s5, %s609
        %p611 = pneg %p156
        %p612 = pneg %p153
        %p613 = scmp.lt.s32.totalorder %s30, 1
        %s614 = scalar_select %p613, %s30, 1
        %s615 = scalar_lea.vmem %s6, %s614
        %p616 = pneg %p182
        %p617 = pneg %p179
        %p618 = scmp.lt.s32.totalorder %s30, 1
        %s619 = scalar_select %p618, %s30, 1
        %s620 = smul.addr %s619, 4
        %s621 = smul.addr %s620, 4
        %s622 = scalar_lea.vmem %s7, %s621
        %p623 = pneg %p208
        %p624 = pneg %p205
        %p625 = scmp.lt.s32.totalorder %s30, 1
        %s626 = scalar_select %p625, %s30, 1
        %s627 = scalar_lea.vmem %s8, %s626
        %p628 = pneg %p234
        %p629 = pneg %p231
        %p630 = scmp.lt.s32.totalorder %s30, 1
        %s631 = scalar_select %p630, %s30, 1
        %s632 = scalar_lea.vmem %s9, %s631
        %p633 = pneg %p260
        %p634 = pneg %p257
        %p635 = scmp.lt.s32.totalorder %s30, 1
        %s636 = scalar_select %p635, %s30, 1
        %s637 = scalar_lea.vmem %s10, %s636
        %p638 = pneg %p286
        %p639 = pneg %p283
        %p640 = scmp.lt.s32.totalorder %s30, 1
        %s641 = scalar_select %p640, %s30, 1
        %s642 = smul.addr %s641, 4
        %s643 = smul.addr %s642, 4
        %s644 = scalar_lea.vmem %s11, %s643
        %p645 = pneg %p312
        %p646 = pneg %p309
        %p647 = scmp.lt.s32.totalorder %s30, 1
        %s648 = scalar_select %p647, %s30, 1
        %s649 = scalar_lea.vmem %s12, %s648
        %p650 = pneg %p338
        %p651 = pneg %p335
        %p652 = scmp.lt.s32.totalorder %s30, 1
        %s653 = scalar_select %p652, %s30, 1
        %s654 = smul.addr %s653, 8
        %s655 = smul.addr %s654, 4
        %s656 = scalar_lea.vmem %s13, %s655
        %p657 = pneg %p364
        %p658 = pneg %p361
        %p659 = scmp.lt.s32.totalorder %s30, 1
        %s660 = scalar_select %p659, %s30, 1
        %s661 = scalar_lea.vmem %s14, %s660
        %p662 = pneg %p390
        %p663 = pneg %p387
        %p664 = scmp.lt.s32.totalorder %s30, 1
        %s665 = scalar_select %p664, %s30, 1
        %s666 = scalar_lea.vmem %s15, %s665
        %p667 = pneg %p416
        %p668 = pneg %p413
        %p669 = scmp.lt.s32.totalorder %s30, 1
        %s670 = scalar_select %p669, %s30, 1
        %s671 = scalar_lea.vmem %s16, %s670
        %p672 = pneg %p442
        %p673 = pneg %p439
        %p674 = pneg %p463
        %p675 = pneg %p460
        %p676 = scmp.lt.s32.totalorder %s30, 1
        %s677 = scalar_select %p676, %s30, 1
        %s678 = smul.addr %s677, 4
        %s679 = smul.addr %s678, 4
        %s680 = scalar_lea.vmem %s5, %s679
        %p681 = scmp.lt.s32.totalorder %s30, 1
        %s682 = scalar_select %p681, %s30, 1
        %s683 = scalar_lea.vmem %s6, %s682
        %p684 = scmp.lt.s32.totalorder %s30, 1
        %s685 = scalar_select %p684, %s30, 1
        %s686 = smul.addr %s685, 4
        %s687 = smul.addr %s686, 4
        %s688 = scalar_lea.vmem %s7, %s687
        %p689 = scmp.lt.s32.totalorder %s30, 1
        %s690 = scalar_select %p689, %s30, 1
        %s691 = scalar_lea.vmem %s8, %s690
        %p692 = scmp.lt.s32.totalorder %s30, 1
        %s693 = scalar_select %p692, %s30, 1
        %s694 = scalar_lea.vmem %s9, %s693
        %p695 = scmp.lt.s32.totalorder %s30, 1
        %s696 = scalar_select %p695, %s30, 1
        %s697 = scalar_lea.vmem %s10, %s696
        %p698 = scmp.lt.s32.totalorder %s30, 1
        %s699 = scalar_select %p698, %s30, 1
        %s700 = smul.addr %s699, 4
        %s701 = smul.addr %s700, 4
        %s702 = scalar_lea.vmem %s11, %s701
        %p703 = scmp.lt.s32.totalorder %s30, 1
        %s704 = scalar_select %p703, %s30, 1
        %s705 = scalar_lea.vmem %s12, %s704
        %p706 = scmp.lt.s32.totalorder %s30, 1
        %s707 = scalar_select %p706, %s30, 1
        %s708 = smul.addr %s707, 8
        %s709 = smul.addr %s708, 4
        %s710 = scalar_lea.vmem %s13, %s709
        %p711 = scmp.lt.s32.totalorder %s30, 1
        %s712 = scalar_select %p711, %s30, 1
        %s713 = scalar_lea.vmem %s14, %s712
        %p714 = scmp.lt.s32.totalorder %s30, 1
        %s715 = scalar_select %p714, %s30, 1
        %s716 = scalar_lea.vmem %s15, %s715
        %p717 = scmp.lt.s32.totalorder %s30, 1
        %s718 = scalar_select %p717, %s30, 1
        %s719 = scalar_lea.vmem %s16, %s718
        %p721 = scmp.eq.s32.totalorder %s30, 0
        // Predicated region
        $region93: #{tpu_custom_call.1} parent=87 // pred_check
          %p722 = pneg %p721
        $region94: #{tpu_custom_call.1} parent=87 // pred_check_branch
          %724 = sbr.rel (%p722) target = $region96
        $region95: #{tpu_custom_call.1} parent=87 // pred_region
          %v725 = vld [vmem:[%s0] sm:$0xff]
          %v726 = vld [vmem:[%s0 + $0x8] sm:$0xff]
          %vm727 = vcmask 261120
          %728 = vst.msk [vmem:[#allocation2] sm:$0xff] %vm727, %v725
          %729 = vst.msk [vmem:[#allocation2 + $0x8] sm:$0xff] %vm727, %v726
        $region96: #{tpu_custom_call.1} parent=87 // pred_fallthru
          _
        %v730 = vld [vmem:[#allocation2] sm:$0xff]
        %v731 = vld [vmem:[#allocation2 + $0x8] sm:$0xff]
        %v732 = vpack.c.bf16 %v731, %v730
        %v733 = vld [vmem:[%s680] sm:$0xf]
        %v734 = vld [vmem:[%s680 + $0x4] sm:$0xf]
        %v735 = vld [vmem:[%s680 + $0x8] sm:$0xf]
        %v736 = vld [vmem:[%s680 + $0xc] sm:$0xf]
        %v737 = vld [vmem:[%s683] sm:$0x1]
        %v739 = vlaneseq
        %v740 = vshrl.u32 %v739, 7
        %v741 = vsub.s32 0, %v740
        %v742 = vrot.slane %v737, %v741
        %v748 = vunpack.c.l.b16 %v733
        %v749 = vunpack.c.l.b16 %v734
        %v750 = vunpack.c.l.b16 %v735
        %v751 = vunpack.c.l.b16 %v736
        %v752 = vpack.c.b16 %v749, %v748
        %v753 = vpack.c.b16 %v751, %v750
        %vm756 = vcmask 261120
        %v758 = vsel %vm756, %v732, 0
        %760 = vmatprep.subr.bf16.mxu0 0
        %761 = vmatpush1.bf16.msra.mxu0 %v752
        %762 = vmatprep.subr.bf16.mxu0 0
        %763 = vmatpush1.bf16.msra.mxu0 %v753
        %764 = vmatprep.subr.bf16.mxu0 0
        %765 = vmatpush1.bf16.msra.mxu0 0
        %766 = vmatprep.subr.bf16.mxu0 0
        %767 = vmatpush1.bf16.msra.mxu0 0
        %768 = vmatprep.subr.bf16.mxu0 0
        %769 = vmatpush1.bf16.msra.mxu0 0
        %770 = vmatprep.subr.bf16.mxu0 0
        %771 = vmatpush1.bf16.msra.mxu0 0
        %772 = vmatprep.subr.bf16.mxu0 0
        %773 = vmatpush1.bf16.msra.mxu0 0
        %774 = vmatprep.subr.bf16.mxu0 0
        %775 = vmatpush1.bf16.msra.mxu0 0
        %776 = vmatprep.subr.bf16.mxu0 0
        %777 = vmatpush1.bf16.msra.mxu0 0
        %778 = vmatprep.subr.bf16.mxu0 0
        %779 = vmatpush1.bf16.msra.mxu0 0
        %780 = vmatprep.subr.bf16.mxu0 0
        %781 = vmatpush1.bf16.msra.mxu0 0
        %782 = vmatprep.subr.bf16.mxu0 0
        %783 = vmatpush1.bf16.msra.mxu0 0
        %784 = vmatprep.subr.bf16.mxu0 0
        %785 = vmatpush1.bf16.msra.mxu0 0
        %786 = vmatprep.subr.bf16.mxu0 0
        %787 = vmatpush1.bf16.msra.mxu0 0
        %788 = vmatprep.subr.bf16.mxu0 0
        %789 = vmatpush1.bf16.msra.mxu0 0
        %790 = vmatprep.subr.bf16.mxu0 0
        %791 = vmatpush1.bf16.msra.mxu0 0
        %792 = vmatprep.mubr.bf16.mxu0 0
        %793 = vmatmul.mubr.bf16.gmra.mrb[0].mxu0 %v758
        %v794 = vpop.f32.mrb[0].mxu0
        %v795 = vadd.f32 %v742, %v794
        %v796 = vpop.f32.mrb[0].mxu0
        %v797 = vpop.f32.mrb[0].mxu0
        %v798 = vadd.f32 %v742, %v797
        %v799 = vpop.f32.mrb[0].mxu0
        %800 = vdwg.mxu0
        %v801 = vpack.c.bf16 %v795, %v795
        %v802 = vpack.c.bf16 %v798, %v798
        %v803 = vld [vmem:[%s1] sm:$0x1]
        %v804 = vld [vmem:[%s1 + $0x1] sm:$0x1]
        %v805 = vld [vmem:[%s688] sm:$0xf]
        %v806 = vld [vmem:[%s688 + $0x4] sm:$0xf]
        %v807 = vld [vmem:[%s688 + $0x8] sm:$0xf]
        %v808 = vld [vmem:[%s688 + $0xc] sm:$0xf]
        %810 = vrot.lane.b32.xlu0 %v801, 96
        %v811 = vpop.permute.xlu0 %810
        %vm812 = vcmask 64512
        %v814 = vsel %vm812, %v801, 0
        %v817 = vsel %vm812, %v811, 0
        %819 = vmatprep.subr.bf16.mxu0 0
        %820 = vmatpush1.bf16.xpose.msra.mxu0 %v817
        %821 = vmatprep.subr.bf16.mxu0 0
        %822 = vmatpush1.bf16.xpose.msra.mxu0 0
        %823 = vmatprep.subr.bf16.mxu0 0
        %824 = vmatpush1.bf16.xpose.msra.mxu0 0
        %825 = vmatprep.subr.bf16.mxu0 0
        %826 = vmatpush1.bf16.xpose.msra.mxu0 0
        %827 = vmatprep.subr.bf16.mxu0 0
        %828 = vmatpush1.bf16.xpose.msra.mxu0 0
        %829 = vmatprep.subr.bf16.mxu0 0
        %830 = vmatpush1.bf16.xpose.msra.mxu0 0
        %831 = vmatprep.subr.bf16.mxu0 0
        %832 = vmatpush1.bf16.xpose.msra.mxu0 0
        %833 = vmatprep.subr.bf16.mxu0 0
        %834 = vmatpush1.bf16.xpose.msra.mxu0 0
        %835 = vmatprep.subr.bf16.mxu0 0
        %836 = vmatpush1.bf16.xpose.msra.mxu0 0
        %837 = vmatprep.subr.bf16.mxu0 0
        %838 = vmatpush1.bf16.xpose.msra.mxu0 0
        %839 = vmatprep.subr.bf16.mxu0 0
        %840 = vmatpush1.bf16.xpose.msra.mxu0 0
        %841 = vmatprep.subr.bf16.mxu0 0
        %842 = vmatpush1.bf16.xpose.msra.mxu0 0
        %843 = vmatprep.subr.bf16.mxu0 0
        %844 = vmatpush1.bf16.xpose.msra.mxu0 0
        %845 = vmatprep.subr.bf16.mxu0 0
        %846 = vmatpush1.bf16.xpose.msra.mxu0 0
        %847 = vmatprep.subr.bf16.mxu0 0
        %848 = vmatpush1.bf16.xpose.msra.mxu0 0
        %849 = vmatprep.subr.bf16.mxu0 0
        %850 = vmatpush1.bf16.xpose.msra.mxu0 0
        %851 = vmatprep.mubr.bf16.mxu0 0
        %852 = vmatmul.mubr.bf16.gmra.mrb[0].mxu0 %v814
        %v853 = vpop.f32.mrb[0].mxu0
        %v854 = vadd.f32 0.0, %v853
        %v855 = vpop.f32.mrb[0].mxu0
        %v856 = vpop.f32.mrb[0].mxu0
        %v857 = vpop.f32.mrb[0].mxu0
        %858 = vdwg.mxu0
        %860 = vrot.lane.b32.xlu0 %v802, 96
        %v861 = vpop.permute.xlu0 %860
        %v863 = vsel %vm812, %v802, 0
        %v866 = vsel %vm812, %v861, 0
        %868 = vmatprep.subr.bf16.mxu0 0
        %869 = vmatpush1.bf16.xpose.msra.mxu0 %v866
        %870 = vmatprep.subr.bf16.mxu0 0
        %871 = vmatpush1.bf16.xpose.msra.mxu0 0
        %872 = vmatprep.subr.bf16.mxu0 0
        %873 = vmatpush1.bf16.xpose.msra.mxu0 0
        %874 = vmatprep.subr.bf16.mxu0 0
        %875 = vmatpush1.bf16.xpose.msra.mxu0 0
        %876 = vmatprep.subr.bf16.mxu0 0
        %877 = vmatpush1.bf16.xpose.msra.mxu0 0
        %878 = vmatprep.subr.bf16.mxu0 0
        %879 = vmatpush1.bf16.xpose.msra.mxu0 0
        %880 = vmatprep.subr.bf16.mxu0 0
        %881 = vmatpush1.bf16.xpose.msra.mxu0 0
        %882 = vmatprep.subr.bf16.mxu0 0
        %883 = vmatpush1.bf16.xpose.msra.mxu0 0
        %884 = vmatprep.subr.bf16.mxu0 0
        %885 = vmatpush1.bf16.xpose.msra.mxu0 0
        %886 = vmatprep.subr.bf16.mxu0 0
        %887 = vmatpush1.bf16.xpose.msra.mxu0 0
        %888 = vmatprep.subr.bf16.mxu0 0
        %889 = vmatpush1.bf16.xpose.msra.mxu0 0
        %890 = vmatprep.subr.bf16.mxu0 0
        %891 = vmatpush1.bf16.xpose.msra.mxu0 0
        %892 = vmatprep.subr.bf16.mxu0 0
        %893 = vmatpush1.bf16.xpose.msra.mxu0 0
        %894 = vmatprep.subr.bf16.mxu0 0
        %895 = vmatpush1.bf16.xpose.msra.mxu0 0
        %896 = vmatprep.subr.bf16.mxu0 0
        %897 = vmatpush1.bf16.xpose.msra.mxu0 0
        %898 = vmatprep.subr.bf16.mxu0 0
        %899 = vmatpush1.bf16.xpose.msra.mxu0 0
        %900 = vmatprep.mubr.bf16.mxu0 0
        %901 = vmatmul.mubr.bf16.gmra.mrb[0].mxu0 %v863
        %v902 = vpop.f32.mrb[0].mxu0
        %v903 = vadd.f32 0.0, %v902
        %v904 = vpop.f32.mrb[0].mxu0
        %v905 = vpop.f32.mrb[0].mxu0
        %v906 = vpop.f32.mrb[0].mxu0
        %907 = vdwg.mxu0
        %v908 = vmul.f32 %v854, 0.35355338
        %v909 = vmul.f32 %v903, 0.35355338
        %v912 = vlaneseq
        %v913 = vshrl.u32 %v912, 7
        %v914 = vsub.s32 0, %v913
        %v915 = vrot.slane %v803, %v914
        %v916 = vlaneseq
        %v917 = vshrl.u32 %v916, 7
        %v918 = vsub.s32 0, %v917
        %v919 = vrot.slane %v804, %v918
        %v922 = vadd.f32 %v908, %v915
        %v923 = vadd.f32 %v909, %v919
        %v924 = vsel %vm812, %v922, -inf
        %925 = vmax.xlane.f32.xlu0 %v924
        %v926 = vpop.xlane.xlu0 %925
        %v927 = vsel %vm812, %v923, -inf
        %928 = vmax.xlane.f32.xlu0 %v927
        %v929 = vpop.xlane.xlu0 %928
        %v930 = vsub.f32 %v922, %v926
        %v931 = vsub.f32 %v923, %v929
        %v932 = vmul.f32 %v930, 1.442695
        %v933 = vpow.pop %v932
        %v934 = vmul.f32 %v931, 1.442695
        %v935 = vpow.pop %v934
        %v936 = vsel %vm812, %v933, 0.0
        %937 = vadd.xlane.f32.xlu0 %v936
        %v938 = vpop.xlane.xlu0 %937
        %v939 = vsel %vm812, %v935, 0.0
        %940 = vadd.xlane.f32.xlu0 %v939
        %v941 = vpop.xlane.xlu0 %940
        %v942 = vrcp.pop %v938
        %v943 = vrcp.pop %v941
        %v944 = vmul.f32 %v933, %v942
        %v945 = vmul.f32 %v935, %v943
        %v946 = vpack.c.bf16 %v944, %v944
        %v947 = vpack.c.bf16 %v945, %v945
        %948 = vrot.lane.b32.xlu0 %v801, 64
        %v949 = vpop.permute.xlu0 %948
        %v951 = vsel %vm812, %v946, 0
        %vm953 = vcmask 1043456
        %v955 = vsel %vm953, %v949, 0
        %957 = vmatprep.subr.bf16.mxu0 0
        %958 = vmatpush1.bf16.msra.mxu0 %v955
        %959 = vmatprep.subr.bf16.mxu0 0
        %960 = vmatpush1.bf16.msra.mxu0 0
        %961 = vmatprep.subr.bf16.mxu0 0
        %962 = vmatpush1.bf16.msra.mxu0 0
        %963 = vmatprep.subr.bf16.mxu0 0
        %964 = vmatpush1.bf16.msra.mxu0 0
        %965 = vmatprep.subr.bf16.mxu0 0
        %966 = vmatpush1.bf16.msra.mxu0 0
        %967 = vmatprep.subr.bf16.mxu0 0
        %968 = vmatpush1.bf16.msra.mxu0 0
        %969 = vmatprep.subr.bf16.mxu0 0
        %970 = vmatpush1.bf16.msra.mxu0 0
        %971 = vmatprep.subr.bf16.mxu0 0
        %972 = vmatpush1.bf16.msra.mxu0 0
        %973 = vmatprep.subr.bf16.mxu0 0
        %974 = vmatpush1.bf16.msra.mxu0 0
        %975 = vmatprep.subr.bf16.mxu0 0
        %976 = vmatpush1.bf16.msra.mxu0 0
        %977 = vmatprep.subr.bf16.mxu0 0
        %978 = vmatpush1.bf16.msra.mxu0 0
        %979 = vmatprep.subr.bf16.mxu0 0
        %980 = vmatpush1.bf16.msra.mxu0 0
        %981 = vmatprep.subr.bf16.mxu0 0
        %982 = vmatpush1.bf16.msra.mxu0 0
        %983 = vmatprep.subr.bf16.mxu0 0
        %984 = vmatpush1.bf16.msra.mxu0 0
        %985 = vmatprep.subr.bf16.mxu0 0
        %986 = vmatpush1.bf16.msra.mxu0 0
        %987 = vmatprep.subr.bf16.mxu0 0
        %988 = vmatpush1.bf16.msra.mxu0 0
        %989 = vmatprep.mubr.bf16.mxu0 0
        %990 = vmatmul.mubr.bf16.gmra.mrb[0].mxu0 %v951
        %v991 = vpop.f32.mrb[0].mxu0
        %v992 = vadd.f32 0.0, %v991
        %v993 = vpop.f32.mrb[0].mxu0
        %v994 = vpop.f32.mrb[0].mxu0
        %v995 = vpop.f32.mrb[0].mxu0
        %996 = vdwg.mxu0
        %997 = vrot.lane.b32.xlu0 %v802, 64
        %v998 = vpop.permute.xlu0 %997
        %v1000 = vsel %vm812, %v947, 0
        %v1003 = vsel %vm953, %v998, 0
        %1005 = vmatprep.subr.bf16.mxu0 0
        %1006 = vmatpush1.bf16.msra.mxu0 %v1003
        %1007 = vmatprep.subr.bf16.mxu0 0
        %1008 = vmatpush1.bf16.msra.mxu0 0
        %1009 = vmatprep.subr.bf16.mxu0 0
        %1010 = vmatpush1.bf16.msra.mxu0 0
        %1011 = vmatprep.subr.bf16.mxu0 0
        %1012 = vmatpush1.bf16.msra.mxu0 0
        %1013 = vmatprep.subr.bf16.mxu0 0
        %1014 = vmatpush1.bf16.msra.mxu0 0
        %1015 = vmatprep.subr.bf16.mxu0 0
        %1016 = vmatpush1.bf16.msra.mxu0 0
        %1017 = vmatprep.subr.bf16.mxu0 0
        %1018 = vmatpush1.bf16.msra.mxu0 0
        %1019 = vmatprep.subr.bf16.mxu0 0
        %1020 = vmatpush1.bf16.msra.mxu0 0
        %1021 = vmatprep.subr.bf16.mxu0 0
        %1022 = vmatpush1.bf16.msra.mxu0 0
        %1023 = vmatprep.subr.bf16.mxu0 0
        %1024 = vmatpush1.bf16.msra.mxu0 0
        %1025 = vmatprep.subr.bf16.mxu0 0
        %1026 = vmatpush1.bf16.msra.mxu0 0
        %1027 = vmatprep.subr.bf16.mxu0 0
        %1028 = vmatpush1.bf16.msra.mxu0 0
        %1029 = vmatprep.subr.bf16.mxu0 0
        %1030 = vmatpush1.bf16.msra.mxu0 0
        %1031 = vmatprep.subr.bf16.mxu0 0
        %1032 = vmatpush1.bf16.msra.mxu0 0
        %1033 = vmatprep.subr.bf16.mxu0 0
        %1034 = vmatpush1.bf16.msra.mxu0 0
        %1035 = vmatprep.subr.bf16.mxu0 0
        %1036 = vmatpush1.bf16.msra.mxu0 0
        %1037 = vmatprep.mubr.bf16.mxu0 0
        %1038 = vmatmul.mubr.bf16.gmra.mrb[0].mxu0 %v1000
        %v1039 = vpop.f32.mrb[0].mxu0
        %v1040 = vadd.f32 0.0, %v1039
        %v1041 = vpop.f32.mrb[0].mxu0
        %v1042 = vpop.f32.mrb[0].mxu0
        %v1043 = vpop.f32.mrb[0].mxu0
        %1044 = vdwg.mxu0
        %v1045 = vpack.c.bf16 %v1040, %v992
        %1046 = vrot.lane.b32.xlu0 %v801, 120
        %v1047 = vpop.permute.xlu0 %1046
        %1048 = vrot.lane.b32.xlu0 %v801, 88
        %v1049 = vpop.permute.xlu0 %1048
        %v1051 = vsel %vm812, %v1047, 0
        %v1054 = vsel %vm812, %v1049, 0
        %1056 = vmatprep.subr.bf16.mxu0 0
        %1057 = vmatpush1.bf16.xpose.msra.mxu0 %v1054
        %1058 = vmatprep.subr.bf16.mxu0 0
        %1059 = vmatpush1.bf16.xpose.msra.mxu0 0
        %1060 = vmatprep.subr.bf16.mxu0 0
        %1061 = vmatpush1.bf16.xpose.msra.mxu0 0
        %1062 = vmatprep.subr.bf16.mxu0 0
        %1063 = vmatpush1.bf16.xpose.msra.mxu0 0
        %1064 = vmatprep.subr.bf16.mxu0 0
        %1065 = vmatpush1.bf16.xpose.msra.mxu0 0
        %1066 = vmatprep.subr.bf16.mxu0 0
        %1067 = vmatpush1.bf16.xpose.msra.mxu0 0
        %1068 = vmatprep.subr.bf16.mxu0 0
        %1069 = vmatpush1.bf16.xpose.msra.mxu0 0
        %1070 = vmatprep.subr.bf16.mxu0 0
        %1071 = vmatpush1.bf16.xpose.msra.mxu0 0
        %1072 = vmatprep.subr.bf16.mxu0 0
        %1073 = vmatpush1.bf16.xpose.msra.mxu0 0
        %1074 = vmatprep.subr.bf16.mxu0 0
        %1075 = vmatpush1.bf16.xpose.msra.mxu0 0
        %1076 = vmatprep.subr.bf16.mxu0 0
        %1077 = vmatpush1.bf16.xpose.msra.mxu0 0
        %1078 = vmatprep.subr.bf16.mxu0 0
        %1079 = vmatpush1.bf16.xpose.msra.mxu0 0
        %1080 = vmatprep.subr.bf16.mxu0 0
        %1081 = vmatpush1.bf16.xpose.msra.mxu0 0
        %1082 = vmatprep.subr.bf16.mxu0 0
        %1083 = vmatpush1.bf16.xpose.msra.mxu0 0
        %1084 = vmatprep.subr.bf16.mxu0 0
        %1085 = vmatpush1.bf16.xpose.msra.mxu0 0
        %1086 = vmatprep.subr.bf16.mxu0 0
        %1087 = vmatpush1.bf16.xpose.msra.mxu0 0
        %1088 = vmatprep.mubr.bf16.mxu0 0
        %1089 = vmatmul.mubr.bf16.gmra.mrb[0].mxu0 %v1051
        %v1090 = vpop.f32.mrb[0].mxu0
        %v1091 = vadd.f32 0.0, %v1090
        %v1092 = vpop.f32.mrb[0].mxu0
        %v1093 = vpop.f32.mrb[0].mxu0
        %v1094 = vpop.f32.mrb[0].mxu0
        %1095 = vdwg.mxu0
        %1096 = vrot.lane.b32.xlu0 %v802, 120
        %v1097 = vpop.permute.xlu0 %1096
        %1098 = vrot.lane.b32.xlu0 %v802, 88
        %v1099 = vpop.permute.xlu0 %1098
        %v1101 = vsel %vm812, %v1097, 0
        %v1104 = vsel %vm812, %v1099, 0
        %1106 = vmatprep.subr.bf16.mxu0 0
        %1107 = vmatpush1.bf16.xpose.msra.mxu0 %v1104
        %1108 = vmatprep.subr.bf16.mxu0 0
        %1109 = vmatpush1.bf16.xpose.msra.mxu0 0
        %1110 = vmatprep.subr.bf16.mxu0 0
        %1111 = vmatpush1.bf16.xpose.msra.mxu0 0
        %1112 = vmatprep.subr.bf16.mxu0 0
        %1113 = vmatpush1.bf16.xpose.msra.mxu0 0
        %1114 = vmatprep.subr.bf16.mxu0 0
        %1115 = vmatpush1.bf16.xpose.msra.mxu0 0
        %1116 = vmatprep.subr.bf16.mxu0 0
        %1117 = vmatpush1.bf16.xpose.msra.mxu0 0
        %1118 = vmatprep.subr.bf16.mxu0 0
        %1119 = vmatpush1.bf16.xpose.msra.mxu0 0
        %1120 = vmatprep.subr.bf16.mxu0 0
        %1121 = vmatpush1.bf16.xpose.msra.mxu0 0
        %1122 = vmatprep.subr.bf16.mxu0 0
        %1123 = vmatpush1.bf16.xpose.msra.mxu0 0
        %1124 = vmatprep.subr.bf16.mxu0 0
        %1125 = vmatpush1.bf16.xpose.msra.mxu0 0
        %1126 = vmatprep.subr.bf16.mxu0 0
        %1127 = vmatpush1.bf16.xpose.msra.mxu0 0
        %1128 = vmatprep.subr.bf16.mxu0 0
        %1129 = vmatpush1.bf16.xpose.msra.mxu0 0
        %1130 = vmatprep.subr.bf16.mxu0 0
        %1131 = vmatpush1.bf16.xpose.msra.mxu0 0
        %1132 = vmatprep.subr.bf16.mxu0 0
        %1133 = vmatpush1.bf16.xpose.msra.mxu0 0
        %1134 = vmatprep.subr.bf16.mxu0 0
        %1135 = vmatpush1.bf16.xpose.msra.mxu0 0
        %1136 = vmatprep.subr.bf16.mxu0 0
        %1137 = vmatpush1.bf16.xpose.msra.mxu0 0
        %1138 = vmatprep.mubr.bf16.mxu0 0
        %1139 = vmatmul.mubr.bf16.gmra.mrb[0].mxu0 %v1101
        %v1140 = vpop.f32.mrb[0].mxu0
        %v1141 = vadd.f32 0.0, %v1140
        %v1142 = vpop.f32.mrb[0].mxu0
        %v1143 = vpop.f32.mrb[0].mxu0
        %v1144 = vpop.f32.mrb[0].mxu0
        %1145 = vdwg.mxu0
        %v1146 = vmul.f32 %v1091, 0.35355338
        %v1147 = vmul.f32 %v1141, 0.35355338
        %v1148 = vadd.f32 %v1146, %v915
        %v1149 = vadd.f32 %v1147, %v919
        %v1150 = vsel %vm812, %v1148, -inf
        %1151 = vmax.xlane.f32.xlu0 %v1150
        %v1152 = vpop.xlane.xlu0 %1151
        %v1153 = vsel %vm812, %v1149, -inf
        %1154 = vmax.xlane.f32.xlu0 %v1153
        %v1155 = vpop.xlane.xlu0 %1154
        %v1156 = vsub.f32 %v1148, %v1152
        %v1157 = vsub.f32 %v1149, %v1155
        %v1158 = vmul.f32 %v1156, 1.442695
        %v1159 = vpow.pop %v1158
        %v1160 = vmul.f32 %v1157, 1.442695
        %v1161 = vpow.pop %v1160
        %v1162 = vsel %vm812, %v1159, 0.0
        %1163 = vadd.xlane.f32.xlu0 %v1162
        %v1164 = vpop.xlane.xlu0 %1163
        %v1165 = vsel %vm812, %v1161, 0.0
        %1166 = vadd.xlane.f32.xlu0 %v1165
        %v1167 = vpop.xlane.xlu0 %1166
        %v1168 = vrcp.pop %v1164
        %v1169 = vrcp.pop %v1167
        %v1170 = vmul.f32 %v1159, %v1168
        %v1171 = vmul.f32 %v1161, %v1169
        %v1172 = vpack.c.bf16 %v1170, %v1170
        %v1173 = vpack.c.bf16 %v1171, %v1171
        %1174 = vrot.lane.b32.xlu0 %v801, 56
        %v1175 = vpop.permute.xlu0 %1174
        %v1177 = vsel %vm812, %v1172, 0
        %v1180 = vsel %vm953, %v1175, 0
        %1182 = vmatprep.subr.bf16.mxu0 0
        %1183 = vmatpush1.bf16.msra.mxu0 %v1180
        %1184 = vmatprep.subr.bf16.mxu0 0
        %1185 = vmatpush1.bf16.msra.mxu0 0
        %1186 = vmatprep.subr.bf16.mxu0 0
        %1187 = vmatpush1.bf16.msra.mxu0 0
        %1188 = vmatprep.subr.bf16.mxu0 0
        %1189 = vmatpush1.bf16.msra.mxu0 0
        %1190 = vmatprep.subr.bf16.mxu0 0
        %1191 = vmatpush1.bf16.msra.mxu0 0
        %1192 = vmatprep.subr.bf16.mxu0 0
        %1193 = vmatpush1.bf16.msra.mxu0 0
        %1194 = vmatprep.subr.bf16.mxu0 0
        %1195 = vmatpush1.bf16.msra.mxu0 0
        %1196 = vmatprep.subr.bf16.mxu0 0
        %1197 = vmatpush1.bf16.msra.mxu0 0
        %1198 = vmatprep.subr.bf16.mxu0 0
        %1199 = vmatpush1.bf16.msra.mxu0 0
        %1200 = vmatprep.subr.bf16.mxu0 0
        %1201 = vmatpush1.bf16.msra.mxu0 0
        %1202 = vmatprep.subr.bf16.mxu0 0
        %1203 = vmatpush1.bf16.msra.mxu0 0
        %1204 = vmatprep.subr.bf16.mxu0 0
        %1205 = vmatpush1.bf16.msra.mxu0 0
        %1206 = vmatprep.subr.bf16.mxu0 0
        %1207 = vmatpush1.bf16.msra.mxu0 0
        %1208 = vmatprep.subr.bf16.mxu0 0
        %1209 = vmatpush1.bf16.msra.mxu0 0
        %1210 = vmatprep.subr.bf16.mxu0 0
        %1211 = vmatpush1.bf16.msra.mxu0 0
        %1212 = vmatprep.subr.bf16.mxu0 0
        %1213 = vmatpush1.bf16.msra.mxu0 0
        %1214 = vmatprep.mubr.bf16.mxu0 0
        %1215 = vmatmul.mubr.bf16.gmra.mrb[0].mxu0 %v1177
        %v1216 = vpop.f32.mrb[0].mxu0
        %v1217 = vadd.f32 0.0, %v1216
        %v1218 = vpop.f32.mrb[0].mxu0
        %v1219 = vpop.f32.mrb[0].mxu0
        %v1220 = vpop.f32.mrb[0].mxu0
        %1221 = vdwg.mxu0
        %1222 = vrot.lane.b32.xlu0 %v802, 56
        %v1223 = vpop.permute.xlu0 %1222
        %v1225 = vsel %vm812, %v1173, 0
        %v1228 = vsel %vm953, %v1223, 0
        %1230 = vmatprep.subr.bf16.mxu0 0
        %1231 = vmatpush1.bf16.msra.mxu0 %v1228
        %1232 = vmatprep.subr.bf16.mxu0 0
        %1233 = vmatpush1.bf16.msra.mxu0 0
        %1234 = vmatprep.subr.bf16.mxu0 0
        %1235 = vmatpush1.bf16.msra.mxu0 0
        %1236 = vmatprep.subr.bf16.mxu0 0
        %1237 = vmatpush1.bf16.msra.mxu0 0
        %1238 = vmatprep.subr.bf16.mxu0 0
        %1239 = vmatpush1.bf16.msra.mxu0 0
        %1240 = vmatprep.subr.bf16.mxu0 0
        %1241 = vmatpush1.bf16.msra.mxu0 0
        %1242 = vmatprep.subr.bf16.mxu0 0
        %1243 = vmatpush1.bf16.msra.mxu0 0
        %1244 = vmatprep.subr.bf16.mxu0 0
        %1245 = vmatpush1.bf16.msra.mxu0 0
        %1246 = vmatprep.subr.bf16.mxu0 0
        %1247 = vmatpush1.bf16.msra.mxu0 0
        %1248 = vmatprep.subr.bf16.mxu0 0
        %1249 = vmatpush1.bf16.msra.mxu0 0
        %1250 = vmatprep.subr.bf16.mxu0 0
        %1251 = vmatpush1.bf16.msra.mxu0 0
        %1252 = vmatprep.subr.bf16.mxu0 0
        %1253 = vmatpush1.bf16.msra.mxu0 0
        %1254 = vmatprep.subr.bf16.mxu0 0
        %1255 = vmatpush1.bf16.msra.mxu0 0
        %1256 = vmatprep.subr.bf16.mxu0 0
        %1257 = vmatpush1.bf16.msra.mxu0 0
        %1258 = vmatprep.subr.bf16.mxu0 0
        %1259 = vmatpush1.bf16.msra.mxu0 0
        %1260 = vmatprep.subr.bf16.mxu0 0
        %1261 = vmatpush1.bf16.msra.mxu0 0
        %1262 = vmatprep.mubr.bf16.mxu0 0
        %1263 = vmatmul.mubr.bf16.gmra.mrb[0].mxu0 %v1225
        %v1264 = vpop.f32.mrb[0].mxu0
        %v1265 = vadd.f32 0.0, %v1264
        %v1266 = vpop.f32.mrb[0].mxu0
        %v1267 = vpop.f32.mrb[0].mxu0
        %v1268 = vpop.f32.mrb[0].mxu0
        %1269 = vdwg.mxu0
        %v1270 = vpack.c.bf16 %v1265, %v1217
        %v1272 = vsel %vm812, %v1270, 0
        %v1275 = vsel %vm953, %v806, 0
        %1277 = vmatprep.subr.bf16.mxu0 0
        %1278 = vmatpush1.bf16.msra.mxu0 %v1275
        %1279 = vmatprep.subr.bf16.mxu0 0
        %1280 = vmatpush1.bf16.msra.mxu0 0
        %1281 = vmatprep.subr.bf16.mxu0 0
        %1282 = vmatpush1.bf16.msra.mxu0 0
        %1283 = vmatprep.subr.bf16.mxu0 0
        %1284 = vmatpush1.bf16.msra.mxu0 0
        %1285 = vmatprep.subr.bf16.mxu0 0
        %1286 = vmatpush1.bf16.msra.mxu0 0
        %1287 = vmatprep.subr.bf16.mxu0 0
        %1288 = vmatpush1.bf16.msra.mxu0 0
        %1289 = vmatprep.subr.bf16.mxu0 0
        %1290 = vmatpush1.bf16.msra.mxu0 0
        %1291 = vmatprep.subr.bf16.mxu0 0
        %1292 = vmatpush1.bf16.msra.mxu0 0
        %1293 = vmatprep.subr.bf16.mxu0 0
        %1294 = vmatpush1.bf16.msra.mxu0 0
        %1295 = vmatprep.subr.bf16.mxu0 0
        %1296 = vmatpush1.bf16.msra.mxu0 0
        %1297 = vmatprep.subr.bf16.mxu0 0
        %1298 = vmatpush1.bf16.msra.mxu0 0
        %1299 = vmatprep.subr.bf16.mxu0 0
        %1300 = vmatpush1.bf16.msra.mxu0 0
        %1301 = vmatprep.subr.bf16.mxu0 0
        %1302 = vmatpush1.bf16.msra.mxu0 0
        %1303 = vmatprep.subr.bf16.mxu0 0
        %1304 = vmatpush1.bf16.msra.mxu0 0
        %1305 = vmatprep.subr.bf16.mxu0 0
        %1306 = vmatpush1.bf16.msra.mxu0 0
        %1307 = vmatprep.subr.bf16.mxu0 0
        %1308 = vmatpush1.bf16.msra.mxu0 0
        %1309 = vmatprep.mubr.bf16.mxu0 0
        %1310 = vmatmul.mubr.bf16.gmra.mrb[0].mxu0 %v1272
        %v1311 = vpop.f32.mrb[0].mxu0
        %v1312 = vadd.f32 0.0, %v1311
        %v1313 = vpop.f32.mrb[0].mxu0
        %v1314 = vpop.f32.mrb[0].mxu0
        %v1315 = vadd.f32 0.0, %v1314
        %v1316 = vpop.f32.mrb[0].mxu0
        %1317 = vdwg.mxu0
        %v1319 = vsel %vm812, %v1045, 0
        %v1322 = vsel %vm953, %v805, 0
        %1324 = vmatprep.subr.bf16.mxu0 0
        %1325 = vmatpush1.bf16.msra.mxu0 %v1322
        %1326 = vmatprep.subr.bf16.mxu0 0
        %1327 = vmatpush1.bf16.msra.mxu0 0
        %1328 = vmatprep.subr.bf16.mxu0 0
        %1329 = vmatpush1.bf16.msra.mxu0 0
        %1330 = vmatprep.subr.bf16.mxu0 0
        %1331 = vmatpush1.bf16.msra.mxu0 0
        %1332 = vmatprep.subr.bf16.mxu0 0
        %1333 = vmatpush1.bf16.msra.mxu0 0
        %1334 = vmatprep.subr.bf16.mxu0 0
        %1335 = vmatpush1.bf16.msra.mxu0 0
        %1336 = vmatprep.subr.bf16.mxu0 0
        %1337 = vmatpush1.bf16.msra.mxu0 0
        %1338 = vmatprep.subr.bf16.mxu0 0
        %1339 = vmatpush1.bf16.msra.mxu0 0
        %1340 = vmatprep.subr.bf16.mxu0 0
        %1341 = vmatpush1.bf16.msra.mxu0 0
        %1342 = vmatprep.subr.bf16.mxu0 0
        %1343 = vmatpush1.bf16.msra.mxu0 0
        %1344 = vmatprep.subr.bf16.mxu0 0
        %1345 = vmatpush1.bf16.msra.mxu0 0
        %1346 = vmatprep.subr.bf16.mxu0 0
        %1347 = vmatpush1.bf16.msra.mxu0 0
        %1348 = vmatprep.subr.bf16.mxu0 0
        %1349 = vmatpush1.bf16.msra.mxu0 0
        %1350 = vmatprep.subr.bf16.mxu0 0
        %1351 = vmatpush1.bf16.msra.mxu0 0
        %1352 = vmatprep.subr.bf16.mxu0 0
        %1353 = vmatpush1.bf16.msra.mxu0 0
        %1354 = vmatprep.subr.bf16.mxu0 0
        %1355 = vmatpush1.bf16.msra.mxu0 0
        %1356 = vmatprep.mubr.bf16.mxu0 0
        %1357 = vmatmul.mubr.bf16.gmra.mrb[0].mxu0 %v1319
        %v1358 = vpop.f32.mrb[0].mxu0
        %v1359 = vadd.f32 %v1312, %v1358
        %v1360 = vpop.f32.mrb[0].mxu0
        %v1361 = vpop.f32.mrb[0].mxu0
        %v1362 = vadd.f32 %v1315, %v1361
        %v1363 = vpop.f32.mrb[0].mxu0
        %1364 = vdwg.mxu0
        %1365 = vrot.lane.b32.xlu0 %v801, 112
        %v1366 = vpop.permute.xlu0 %1365
        %1367 = vrot.lane.b32.xlu0 %v801, 80
        %v1368 = vpop.permute.xlu0 %1367
        %v1370 = vsel %vm812, %v1366, 0
        %v1373 = vsel %vm812, %v1368, 0
        %1375 = vmatprep.subr.bf16.mxu0 0
        %1376 = vmatpush1.bf16.xpose.msra.mxu0 %v1373
        %1377 = vmatprep.subr.bf16.mxu0 0
        %1378 = vmatpush1.bf16.xpose.msra.mxu0 0
        %1379 = vmatprep.subr.bf16.mxu0 0
        %1380 = vmatpush1.bf16.xpose.msra.mxu0 0
        %1381 = vmatprep.subr.bf16.mxu0 0
        %1382 = vmatpush1.bf16.xpose.msra.mxu0 0
        %1383 = vmatprep.subr.bf16.mxu0 0
        %1384 = vmatpush1.bf16.xpose.msra.mxu0 0
        %1385 = vmatprep.subr.bf16.mxu0 0
        %1386 = vmatpush1.bf16.xpose.msra.mxu0 0
        %1387 = vmatprep.subr.bf16.mxu0 0
        %1388 = vmatpush1.bf16.xpose.msra.mxu0 0
        %1389 = vmatprep.subr.bf16.mxu0 0
        %1390 = vmatpush1.bf16.xpose.msra.mxu0 0
        %1391 = vmatprep.subr.bf16.mxu0 0
        %1392 = vmatpush1.bf16.xpose.msra.mxu0 0
        %1393 = vmatprep.subr.bf16.mxu0 0
        %1394 = vmatpush1.bf16.xpose.msra.mxu0 0
        %1395 = vmatprep.subr.bf16.mxu0 0
        %1396 = vmatpush1.bf16.xpose.msra.mxu0 0
        %1397 = vmatprep.subr.bf16.mxu0 0
        %1398 = vmatpush1.bf16.xpose.msra.mxu0 0
        %1399 = vmatprep.subr.bf16.mxu0 0
        %1400 = vmatpush1.bf16.xpose.msra.mxu0 0
        %1401 = vmatprep.subr.bf16.mxu0 0
        %1402 = vmatpush1.bf16.xpose.msra.mxu0 0
        %1403 = vmatprep.subr.bf16.mxu0 0
        %1404 = vmatpush1.bf16.xpose.msra.mxu0 0
        %1405 = vmatprep.subr.bf16.mxu0 0
        %1406 = vmatpush1.bf16.xpose.msra.mxu0 0
        %1407 = vmatprep.mubr.bf16.mxu0 0
        %1408 = vmatmul.mubr.bf16.gmra.mrb[0].mxu0 %v1370
        %v1409 = vpop.f32.mrb[0].mxu0
        %v1410 = vadd.f32 0.0, %v1409
        %v1411 = vpop.f32.mrb[0].mxu0
        %v1412 = vpop.f32.mrb[0].mxu0
        %v1413 = vpop.f32.mrb[0].mxu0
        %1414 = vdwg.mxu0
        %1415 = vrot.lane.b32.xlu0 %v802, 112
        %v1416 = vpop.permute.xlu0 %1415
        %1417 = vrot.lane.b32.xlu0 %v802, 80
        %v1418 = vpop.permute.xlu0 %1417
        %v1420 = vsel %vm812, %v1416, 0
        %v1423 = vsel %vm812, %v1418, 0
        %1425 = vmatprep.subr.bf16.mxu0 0
        %1426 = vmatpush1.bf16.xpose.msra.mxu0 %v1423
        %1427 = vmatprep.subr.bf16.mxu0 0
        %1428 = vmatpush1.bf16.xpose.msra.mxu0 0
        %1429 = vmatprep.subr.bf16.mxu0 0
        %1430 = vmatpush1.bf16.xpose.msra.mxu0 0
        %1431 = vmatprep.subr.bf16.mxu0 0
        %1432 = vmatpush1.bf16.xpose.msra.mxu0 0
        %1433 = vmatprep.subr.bf16.mxu0 0
        %1434 = vmatpush1.bf16.xpose.msra.mxu0 0
        %1435 = vmatprep.subr.bf16.mxu0 0
        %1436 = vmatpush1.bf16.xpose.msra.mxu0 0
        %1437 = vmatprep.subr.bf16.mxu0 0
        %1438 = vmatpush1.bf16.xpose.msra.mxu0 0
        %1439 = vmatprep.subr.bf16.mxu0 0
        %1440 = vmatpush1.bf16.xpose.msra.mxu0 0
        %1441 = vmatprep.subr.bf16.mxu0 0
        %1442 = vmatpush1.bf16.xpose.msra.mxu0 0
        %1443 = vmatprep.subr.bf16.mxu0 0
        %1444 = vmatpush1.bf16.xpose.msra.mxu0 0
        %1445 = vmatprep.subr.bf16.mxu0 0
        %1446 = vmatpush1.bf16.xpose.msra.mxu0 0
        %1447 = vmatprep.subr.bf16.mxu0 0
        %1448 = vmatpush1.bf16.xpose.msra.mxu0 0
        %1449 = vmatprep.subr.bf16.mxu0 0
        %1450 = vmatpush1.bf16.xpose.msra.mxu0 0
        %1451 = vmatprep.subr.bf16.mxu0 0
        %1452 = vmatpush1.bf16.xpose.msra.mxu0 0
        %1453 = vmatprep.subr.bf16.mxu0 0
        %1454 = vmatpush1.bf16.xpose.msra.mxu0 0
        %1455 = vmatprep.subr.bf16.mxu0 0
        %1456 = vmatpush1.bf16.xpose.msra.mxu0 0
        %1457 = vmatprep.mubr.bf16.mxu0 0
        %1458 = vmatmul.mubr.bf16.gmra.mrb[0].mxu0 %v1420
        %v1459 = vpop.f32.mrb[0].mxu0
        %v1460 = vadd.f32 0.0, %v1459
        %v1461 = vpop.f32.mrb[0].mxu0
        %v1462 = vpop.f32.mrb[0].mxu0
        %v1463 = vpop.f32.mrb[0].mxu0
        %1464 = vdwg.mxu0
        %v1465 = vmul.f32 %v1410, 0.35355338
        %v1466 = vmul.f32 %v1460, 0.35355338
        %v1467 = vadd.f32 %v1465, %v915
        %v1468 = vadd.f32 %v1466, %v919
        %v1469 = vsel %vm812, %v1467, -inf
        %1470 = vmax.xlane.f32.xlu0 %v1469
        %v1471 = vpop.xlane.xlu0 %1470
        %v1472 = vsel %vm812, %v1468, -inf
        %1473 = vmax.xlane.f32.xlu0 %v1472
        %v1474 = vpop.xlane.xlu0 %1473
        %v1475 = vsub.f32 %v1467, %v1471
        %v1476 = vsub.f32 %v1468, %v1474
        %v1477 = vmul.f32 %v1475, 1.442695
        %v1478 = vpow.pop %v1477
        %v1479 = vmul.f32 %v1476, 1.442695
        %v1480 = vpow.pop %v1479
        %v1481 = vsel %vm812, %v1478, 0.0
        %1482 = vadd.xlane.f32.xlu0 %v1481
        %v1483 = vpop.xlane.xlu0 %1482
        %v1484 = vsel %vm812, %v1480, 0.0
        %1485 = vadd.xlane.f32.xlu0 %v1484
        %v1486 = vpop.xlane.xlu0 %1485
        %v1487 = vrcp.pop %v1483
        %v1488 = vrcp.pop %v1486
        %v1489 = vmul.f32 %v1478, %v1487
        %v1490 = vmul.f32 %v1480, %v1488
        %v1491 = vpack.c.bf16 %v1489, %v1489
        %v1492 = vpack.c.bf16 %v1490, %v1490
        %1493 = vrot.lane.b32.xlu0 %v801, 48
        %v1494 = vpop.permute.xlu0 %1493
        %v1496 = vsel %vm812, %v1491, 0
        %v1499 = vsel %vm953, %v1494, 0
        %1501 = vmatprep.subr.bf16.mxu0 0
        %1502 = vmatpush1.bf16.msra.mxu0 %v1499
        %1503 = vmatprep.subr.bf16.mxu0 0
        %1504 = vmatpush1.bf16.msra.mxu0 0
        %1505 = vmatprep.subr.bf16.mxu0 0
        %1506 = vmatpush1.bf16.msra.mxu0 0
        %1507 = vmatprep.subr.bf16.mxu0 0
        %1508 = vmatpush1.bf16.msra.mxu0 0
        %1509 = vmatprep.subr.bf16.mxu0 0
        %1510 = vmatpush1.bf16.msra.mxu0 0
        %1511 = vmatprep.subr.bf16.mxu0 0
        %1512 = vmatpush1.bf16.msra.mxu0 0
        %1513 = vmatprep.subr.bf16.mxu0 0
        %1514 = vmatpush1.bf16.msra.mxu0 0
        %1515 = vmatprep.subr.bf16.mxu0 0
        %1516 = vmatpush1.bf16.msra.mxu0 0
        %1517 = vmatprep.subr.bf16.mxu0 0
        %1518 = vmatpush1.bf16.msra.mxu0 0
        %1519 = vmatprep.subr.bf16.mxu0 0
        %1520 = vmatpush1.bf16.msra.mxu0 0
        %1521 = vmatprep.subr.bf16.mxu0 0
        %1522 = vmatpush1.bf16.msra.mxu0 0
        %1523 = vmatprep.subr.bf16.mxu0 0
        %1524 = vmatpush1.bf16.msra.mxu0 0
        %1525 = vmatprep.subr.bf16.mxu0 0
        %1526 = vmatpush1.bf16.msra.mxu0 0
        %1527 = vmatprep.subr.bf16.mxu0 0
        %1528 = vmatpush1.bf16.msra.mxu0 0
        %1529 = vmatprep.subr.bf16.mxu0 0
        %1530 = vmatpush1.bf16.msra.mxu0 0
        %1531 = vmatprep.subr.bf16.mxu0 0
        %1532 = vmatpush1.bf16.msra.mxu0 0
        %1533 = vmatprep.mubr.bf16.mxu0 0
        %1534 = vmatmul.mubr.bf16.gmra.mrb[0].mxu0 %v1496
        %v1535 = vpop.f32.mrb[0].mxu0
        %v1536 = vadd.f32 0.0, %v1535
        %v1537 = vpop.f32.mrb[0].mxu0
        %v1538 = vpop.f32.mrb[0].mxu0
        %v1539 = vpop.f32.mrb[0].mxu0
        %1540 = vdwg.mxu0
        %1541 = vrot.lane.b32.xlu0 %v802, 48
        %v1542 = vpop.permute.xlu0 %1541
        %v1544 = vsel %vm812, %v1492, 0
        %v1547 = vsel %vm953, %v1542, 0
        %1549 = vmatprep.subr.bf16.mxu0 0
        %1550 = vmatpush1.bf16.msra.mxu0 %v1547
        %1551 = vmatprep.subr.bf16.mxu0 0
        %1552 = vmatpush1.bf16.msra.mxu0 0
        %1553 = vmatprep.subr.bf16.mxu0 0
        %1554 = vmatpush1.bf16.msra.mxu0 0
        %1555 = vmatprep.subr.bf16.mxu0 0
        %1556 = vmatpush1.bf16.msra.mxu0 0
        %1557 = vmatprep.subr.bf16.mxu0 0
        %1558 = vmatpush1.bf16.msra.mxu0 0
        %1559 = vmatprep.subr.bf16.mxu0 0
        %1560 = vmatpush1.bf16.msra.mxu0 0
        %1561 = vmatprep.subr.bf16.mxu0 0
        %1562 = vmatpush1.bf16.msra.mxu0 0
        %1563 = vmatprep.subr.bf16.mxu0 0
        %1564 = vmatpush1.bf16.msra.mxu0 0
        %1565 = vmatprep.subr.bf16.mxu0 0
        %1566 = vmatpush1.bf16.msra.mxu0 0
        %1567 = vmatprep.subr.bf16.mxu0 0
        %1568 = vmatpush1.bf16.msra.mxu0 0
        %1569 = vmatprep.subr.bf16.mxu0 0
        %1570 = vmatpush1.bf16.msra.mxu0 0
        %1571 = vmatprep.subr.bf16.mxu0 0
        %1572 = vmatpush1.bf16.msra.mxu0 0
        %1573 = vmatprep.subr.bf16.mxu0 0
        %1574 = vmatpush1.bf16.msra.mxu0 0
        %1575 = vmatprep.subr.bf16.mxu0 0
        %1576 = vmatpush1.bf16.msra.mxu0 0
        %1577 = vmatprep.subr.bf16.mxu0 0
        %1578 = vmatpush1.bf16.msra.mxu0 0
        %1579 = vmatprep.subr.bf16.mxu0 0
        %1580 = vmatpush1.bf16.msra.mxu0 0
        %1581 = vmatprep.mubr.bf16.mxu0 0
        %1582 = vmatmul.mubr.bf16.gmra.mrb[0].mxu0 %v1544
        %v1583 = vpop.f32.mrb[0].mxu0
        %v1584 = vadd.f32 0.0, %v1583
        %v1585 = vpop.f32.mrb[0].mxu0
        %v1586 = vpop.f32.mrb[0].mxu0
        %v1587 = vpop.f32.mrb[0].mxu0
        %1588 = vdwg.mxu0
        %v1589 = vpack.c.bf16 %v1584, %v1536
        %v1591 = vsel %vm812, %v1589, 0
        %v1594 = vsel %vm953, %v807, 0
        %1596 = vmatprep.subr.bf16.mxu0 0
        %1597 = vmatpush1.bf16.msra.mxu0 %v1594
        %1598 = vmatprep.subr.bf16.mxu0 0
        %1599 = vmatpush1.bf16.msra.mxu0 0
        %1600 = vmatprep.subr.bf16.mxu0 0
        %1601 = vmatpush1.bf16.msra.mxu0 0
        %1602 = vmatprep.subr.bf16.mxu0 0
        %1603 = vmatpush1.bf16.msra.mxu0 0
        %1604 = vmatprep.subr.bf16.mxu0 0
        %1605 = vmatpush1.bf16.msra.mxu0 0
        %1606 = vmatprep.subr.bf16.mxu0 0
        %1607 = vmatpush1.bf16.msra.mxu0 0
        %1608 = vmatprep.subr.bf16.mxu0 0
        %1609 = vmatpush1.bf16.msra.mxu0 0
        %1610 = vmatprep.subr.bf16.mxu0 0
        %1611 = vmatpush1.bf16.msra.mxu0 0
        %1612 = vmatprep.subr.bf16.mxu0 0
        %1613 = vmatpush1.bf16.msra.mxu0 0
        %1614 = vmatprep.subr.bf16.mxu0 0
        %1615 = vmatpush1.bf16.msra.mxu0 0
        %1616 = vmatprep.subr.bf16.mxu0 0
        %1617 = vmatpush1.bf16.msra.mxu0 0
        %1618 = vmatprep.subr.bf16.mxu0 0
        %1619 = vmatpush1.bf16.msra.mxu0 0
        %1620 = vmatprep.subr.bf16.mxu0 0
        %1621 = vmatpush1.bf16.msra.mxu0 0
        %1622 = vmatprep.subr.bf16.mxu0 0
        %1623 = vmatpush1.bf16.msra.mxu0 0
        %1624 = vmatprep.subr.bf16.mxu0 0
        %1625 = vmatpush1.bf16.msra.mxu0 0
        %1626 = vmatprep.subr.bf16.mxu0 0
        %1627 = vmatpush1.bf16.msra.mxu0 0
        %1628 = vmatprep.mubr.bf16.mxu0 0
        %1629 = vmatmul.mubr.bf16.gmra.mrb[0].mxu0 %v1591
        %v1630 = vpop.f32.mrb[0].mxu0
        %v1631 = vadd.f32 0.0, %v1630
        %v1632 = vpop.f32.mrb[0].mxu0
        %v1633 = vpop.f32.mrb[0].mxu0
        %v1634 = vadd.f32 0.0, %v1633
        %v1635 = vpop.f32.mrb[0].mxu0
        %1636 = vdwg.mxu0
        %v1637 = vadd.f32 %v1359, %v1631
        %v1638 = vadd.f32 %v1362, %v1634
        %1639 = vrot.lane.b32.xlu0 %v801, 104
        %v1640 = vpop.permute.xlu0 %1639
        %1641 = vrot.lane.b32.xlu0 %v801, 72
        %v1642 = vpop.permute.xlu0 %1641
        %v1644 = vsel %vm812, %v1640, 0
        %v1647 = vsel %vm812, %v1642, 0
        %1649 = vmatprep.subr.bf16.mxu0 0
        %1650 = vmatpush1.bf16.xpose.msra.mxu0 %v1647
        %1651 = vmatprep.subr.bf16.mxu0 0
        %1652 = vmatpush1.bf16.xpose.msra.mxu0 0
        %1653 = vmatprep.subr.bf16.mxu0 0
        %1654 = vmatpush1.bf16.xpose.msra.mxu0 0
        %1655 = vmatprep.subr.bf16.mxu0 0
        %1656 = vmatpush1.bf16.xpose.msra.mxu0 0
        %1657 = vmatprep.subr.bf16.mxu0 0
        %1658 = vmatpush1.bf16.xpose.msra.mxu0 0
        %1659 = vmatprep.subr.bf16.mxu0 0
        %1660 = vmatpush1.bf16.xpose.msra.mxu0 0
        %1661 = vmatprep.subr.bf16.mxu0 0
        %1662 = vmatpush1.bf16.xpose.msra.mxu0 0
        %1663 = vmatprep.subr.bf16.mxu0 0
        %1664 = vmatpush1.bf16.xpose.msra.mxu0 0
        %1665 = vmatprep.subr.bf16.mxu0 0
        %1666 = vmatpush1.bf16.xpose.msra.mxu0 0
        %1667 = vmatprep.subr.bf16.mxu0 0
        %1668 = vmatpush1.bf16.xpose.msra.mxu0 0
        %1669 = vmatprep.subr.bf16.mxu0 0
        %1670 = vmatpush1.bf16.xpose.msra.mxu0 0
        %1671 = vmatprep.subr.bf16.mxu0 0
        %1672 = vmatpush1.bf16.xpose.msra.mxu0 0
        %1673 = vmatprep.subr.bf16.mxu0 0
        %1674 = vmatpush1.bf16.xpose.msra.mxu0 0
        %1675 = vmatprep.subr.bf16.mxu0 0
        %1676 = vmatpush1.bf16.xpose.msra.mxu0 0
        %1677 = vmatprep.subr.bf16.mxu0 0
        %1678 = vmatpush1.bf16.xpose.msra.mxu0 0
        %1679 = vmatprep.subr.bf16.mxu0 0
        %1680 = vmatpush1.bf16.xpose.msra.mxu0 0
        %1681 = vmatprep.mubr.bf16.mxu0 0
        %1682 = vmatmul.mubr.bf16.gmra.mrb[0].mxu0 %v1644
        %v1683 = vpop.f32.mrb[0].mxu0
        %v1684 = vadd.f32 0.0, %v1683
        %v1685 = vpop.f32.mrb[0].mxu0
        %v1686 = vpop.f32.mrb[0].mxu0
        %v1687 = vpop.f32.mrb[0].mxu0
        %1688 = vdwg.mxu0
        %1689 = vrot.lane.b32.xlu0 %v802, 104
        %v1690 = vpop.permute.xlu0 %1689
        %1691 = vrot.lane.b32.xlu0 %v802, 72
        %v1692 = vpop.permute.xlu0 %1691
        %v1694 = vsel %vm812, %v1690, 0
        %v1697 = vsel %vm812, %v1692, 0
        %1699 = vmatprep.subr.bf16.mxu0 0
        %1700 = vmatpush1.bf16.xpose.msra.mxu0 %v1697
        %1701 = vmatprep.subr.bf16.mxu0 0
        %1702 = vmatpush1.bf16.xpose.msra.mxu0 0
        %1703 = vmatprep.subr.bf16.mxu0 0
        %1704 = vmatpush1.bf16.xpose.msra.mxu0 0
        %1705 = vmatprep.subr.bf16.mxu0 0
        %1706 = vmatpush1.bf16.xpose.msra.mxu0 0
        %1707 = vmatprep.subr.bf16.mxu0 0
        %1708 = vmatpush1.bf16.xpose.msra.mxu0 0
        %1709 = vmatprep.subr.bf16.mxu0 0
        %1710 = vmatpush1.bf16.xpose.msra.mxu0 0
        %1711 = vmatprep.subr.bf16.mxu0 0
        %1712 = vmatpush1.bf16.xpose.msra.mxu0 0
        %1713 = vmatprep.subr.bf16.mxu0 0
        %1714 = vmatpush1.bf16.xpose.msra.mxu0 0
        %1715 = vmatprep.subr.bf16.mxu0 0
        %1716 = vmatpush1.bf16.xpose.msra.mxu0 0
        %1717 = vmatprep.subr.bf16.mxu0 0
        %1718 = vmatpush1.bf16.xpose.msra.mxu0 0
        %1719 = vmatprep.subr.bf16.mxu0 0
        %1720 = vmatpush1.bf16.xpose.msra.mxu0 0
        %1721 = vmatprep.subr.bf16.mxu0 0
        %1722 = vmatpush1.bf16.xpose.msra.mxu0 0
        %1723 = vmatprep.subr.bf16.mxu0 0
        %1724 = vmatpush1.bf16.xpose.msra.mxu0 0
        %1725 = vmatprep.subr.bf16.mxu0 0
        %1726 = vmatpush1.bf16.xpose.msra.mxu0 0
        %1727 = vmatprep.subr.bf16.mxu0 0
        %1728 = vmatpush1.bf16.xpose.msra.mxu0 0
        %1729 = vmatprep.subr.bf16.mxu0 0
        %1730 = vmatpush1.bf16.xpose.msra.mxu0 0
        %1731 = vmatprep.mubr.bf16.mxu0 0
        %1732 = vmatmul.mubr.bf16.gmra.mrb[0].mxu0 %v1694
        %v1733 = vpop.f32.mrb[0].mxu0
        %v1734 = vadd.f32 0.0, %v1733
        %v1735 = vpop.f32.mrb[0].mxu0
        %v1736 = vpop.f32.mrb[0].mxu0
        %v1737 = vpop.f32.mrb[0].mxu0
        %1738 = vdwg.mxu0
        %v1739 = vmul.f32 %v1684, 0.35355338
        %v1740 = vmul.f32 %v1734, 0.35355338
        %v1741 = vadd.f32 %v1739, %v915
        %v1742 = vadd.f32 %v1740, %v919
        %v1743 = vsel %vm812, %v1741, -inf
        %1744 = vmax.xlane.f32.xlu0 %v1743
        %v1745 = vpop.xlane.xlu0 %1744
        %v1746 = vsel %vm812, %v1742, -inf
        %1747 = vmax.xlane.f32.xlu0 %v1746
        %v1748 = vpop.xlane.xlu0 %1747
        %v1749 = vsub.f32 %v1741, %v1745
        %v1750 = vsub.f32 %v1742, %v1748
        %v1751 = vmul.f32 %v1749, 1.442695
        %v1752 = vpow.pop %v1751
        %v1753 = vmul.f32 %v1750, 1.442695
        %v1754 = vpow.pop %v1753
        %v1755 = vsel %vm812, %v1752, 0.0
        %1756 = vadd.xlane.f32.xlu0 %v1755
        %v1757 = vpop.xlane.xlu0 %1756
        %v1758 = vsel %vm812, %v1754, 0.0
        %1759 = vadd.xlane.f32.xlu0 %v1758
        %v1760 = vpop.xlane.xlu0 %1759
        %v1761 = vrcp.pop %v1757
        %v1762 = vrcp.pop %v1760
        %v1763 = vmul.f32 %v1752, %v1761
        %v1764 = vmul.f32 %v1754, %v1762
        %v1765 = vpack.c.bf16 %v1763, %v1763
        %v1766 = vpack.c.bf16 %v1764, %v1764
        %1767 = vrot.lane.b32.xlu0 %v801, 40
        %v1768 = vpop.permute.xlu0 %1767
        %v1770 = vsel %vm812, %v1765, 0
        %v1773 = vsel %vm953, %v1768, 0
        %1775 = vmatprep.subr.bf16.mxu0 0
        %1776 = vmatpush1.bf16.msra.mxu0 %v1773
        %1777 = vmatprep.subr.bf16.mxu0 0
        %1778 = vmatpush1.bf16.msra.mxu0 0
        %1779 = vmatprep.subr.bf16.mxu0 0
        %1780 = vmatpush1.bf16.msra.mxu0 0
        %1781 = vmatprep.subr.bf16.mxu0 0
        %1782 = vmatpush1.bf16.msra.mxu0 0
        %1783 = vmatprep.subr.bf16.mxu0 0
        %1784 = vmatpush1.bf16.msra.mxu0 0
        %1785 = vmatprep.subr.bf16.mxu0 0
        %1786 = vmatpush1.bf16.msra.mxu0 0
        %1787 = vmatprep.subr.bf16.mxu0 0
        %1788 = vmatpush1.bf16.msra.mxu0 0
        %1789 = vmatprep.subr.bf16.mxu0 0
        %1790 = vmatpush1.bf16.msra.mxu0 0
        %1791 = vmatprep.subr.bf16.mxu0 0
        %1792 = vmatpush1.bf16.msra.mxu0 0
        %1793 = vmatprep.subr.bf16.mxu0 0
        %1794 = vmatpush1.bf16.msra.mxu0 0
        %1795 = vmatprep.subr.bf16.mxu0 0
        %1796 = vmatpush1.bf16.msra.mxu0 0
        %1797 = vmatprep.subr.bf16.mxu0 0
        %1798 = vmatpush1.bf16.msra.mxu0 0
        %1799 = vmatprep.subr.bf16.mxu0 0
        %1800 = vmatpush1.bf16.msra.mxu0 0
        %1801 = vmatprep.subr.bf16.mxu0 0
        %1802 = vmatpush1.bf16.msra.mxu0 0
        %1803 = vmatprep.subr.bf16.mxu0 0
        %1804 = vmatpush1.bf16.msra.mxu0 0
        %1805 = vmatprep.subr.bf16.mxu0 0
        %1806 = vmatpush1.bf16.msra.mxu0 0
        %1807 = vmatprep.mubr.bf16.mxu0 0
        %1808 = vmatmul.mubr.bf16.gmra.mrb[0].mxu0 %v1770
        %v1809 = vpop.f32.mrb[0].mxu0
        %v1810 = vadd.f32 0.0, %v1809
        %v1811 = vpop.f32.mrb[0].mxu0
        %v1812 = vpop.f32.mrb[0].mxu0
        %v1813 = vpop.f32.mrb[0].mxu0
        %1814 = vdwg.mxu0
        %1815 = vrot.lane.b32.xlu0 %v802, 40
        %v1816 = vpop.permute.xlu0 %1815
        %v1818 = vsel %vm812, %v1766, 0
        %v1821 = vsel %vm953, %v1816, 0
        %1823 = vmatprep.subr.bf16.mxu0 0
        %1824 = vmatpush1.bf16.msra.mxu0 %v1821
        %1825 = vmatprep.subr.bf16.mxu0 0
        %1826 = vmatpush1.bf16.msra.mxu0 0
        %1827 = vmatprep.subr.bf16.mxu0 0
        %1828 = vmatpush1.bf16.msra.mxu0 0
        %1829 = vmatprep.subr.bf16.mxu0 0
        %1830 = vmatpush1.bf16.msra.mxu0 0
        %1831 = vmatprep.subr.bf16.mxu0 0
        %1832 = vmatpush1.bf16.msra.mxu0 0
        %1833 = vmatprep.subr.bf16.mxu0 0
        %1834 = vmatpush1.bf16.msra.mxu0 0
        %1835 = vmatprep.subr.bf16.mxu0 0
        %1836 = vmatpush1.bf16.msra.mxu0 0
        %1837 = vmatprep.subr.bf16.mxu0 0
        %1838 = vmatpush1.bf16.msra.mxu0 0
        %1839 = vmatprep.subr.bf16.mxu0 0
        %1840 = vmatpush1.bf16.msra.mxu0 0
        %1841 = vmatprep.subr.bf16.mxu0 0
        %1842 = vmatpush1.bf16.msra.mxu0 0
        %1843 = vmatprep.subr.bf16.mxu0 0
        %1844 = vmatpush1.bf16.msra.mxu0 0
        %1845 = vmatprep.subr.bf16.mxu0 0
        %1846 = vmatpush1.bf16.msra.mxu0 0
        %1847 = vmatprep.subr.bf16.mxu0 0
        %1848 = vmatpush1.bf16.msra.mxu0 0
        %1849 = vmatprep.subr.bf16.mxu0 0
        %1850 = vmatpush1.bf16.msra.mxu0 0
        %1851 = vmatprep.subr.bf16.mxu0 0
        %1852 = vmatpush1.bf16.msra.mxu0 0
        %1853 = vmatprep.subr.bf16.mxu0 0
        %1854 = vmatpush1.bf16.msra.mxu0 0
        %1855 = vmatprep.mubr.bf16.mxu0 0
        %1856 = vmatmul.mubr.bf16.gmra.mrb[0].mxu0 %v1818
        %v1857 = vpop.f32.mrb[0].mxu0
        %v1858 = vadd.f32 0.0, %v1857
        %v1859 = vpop.f32.mrb[0].mxu0
        %v1860 = vpop.f32.mrb[0].mxu0
        %v1861 = vpop.f32.mrb[0].mxu0
        %1862 = vdwg.mxu0
        %v1863 = vpack.c.bf16 %v1858, %v1810
        %v1865 = vsel %vm812, %v1863, 0
        %v1868 = vsel %vm953, %v808, 0
        %1870 = vmatprep.subr.bf16.mxu0 0
        %1871 = vmatpush1.bf16.msra.mxu0 %v1868
        %1872 = vmatprep.subr.bf16.mxu0 0
        %1873 = vmatpush1.bf16.msra.mxu0 0
        %1874 = vmatprep.subr.bf16.mxu0 0
        %1875 = vmatpush1.bf16.msra.mxu0 0
        %1876 = vmatprep.subr.bf16.mxu0 0
        %1877 = vmatpush1.bf16.msra.mxu0 0
        %1878 = vmatprep.subr.bf16.mxu0 0
        %1879 = vmatpush1.bf16.msra.mxu0 0
        %1880 = vmatprep.subr.bf16.mxu0 0
        %1881 = vmatpush1.bf16.msra.mxu0 0
        %1882 = vmatprep.subr.bf16.mxu0 0
        %1883 = vmatpush1.bf16.msra.mxu0 0
        %1884 = vmatprep.subr.bf16.mxu0 0
        %1885 = vmatpush1.bf16.msra.mxu0 0
        %1886 = vmatprep.subr.bf16.mxu0 0
        %1887 = vmatpush1.bf16.msra.mxu0 0
        %1888 = vmatprep.subr.bf16.mxu0 0
        %1889 = vmatpush1.bf16.msra.mxu0 0
        %1890 = vmatprep.subr.bf16.mxu0 0
        %1891 = vmatpush1.bf16.msra.mxu0 0
        %1892 = vmatprep.subr.bf16.mxu0 0
        %1893 = vmatpush1.bf16.msra.mxu0 0
        %1894 = vmatprep.subr.bf16.mxu0 0
        %1895 = vmatpush1.bf16.msra.mxu0 0
        %1896 = vmatprep.subr.bf16.mxu0 0
        %1897 = vmatpush1.bf16.msra.mxu0 0
        %1898 = vmatprep.subr.bf16.mxu0 0
        %1899 = vmatpush1.bf16.msra.mxu0 0
        %1900 = vmatprep.subr.bf16.mxu0 0
        %1901 = vmatpush1.bf16.msra.mxu0 0
        %1902 = vmatprep.mubr.bf16.mxu0 0
        %1903 = vmatmul.mubr.bf16.gmra.mrb[0].mxu0 %v1865
        %v1904 = vpop.f32.mrb[0].mxu0
        %v1905 = vadd.f32 0.0, %v1904
        %v1906 = vpop.f32.mrb[0].mxu0
        %v1907 = vpop.f32.mrb[0].mxu0
        %v1908 = vadd.f32 0.0, %v1907
        %v1909 = vpop.f32.mrb[0].mxu0
        %1910 = vdwg.mxu0
        %v1911 = vadd.f32 %v1637, %v1905
        %v1912 = vadd.f32 %v1638, %v1908
        %v1913 = vld [vmem:[%s691] sm:$0x1]
        %v1915 = vlaneseq
        %v1916 = vshrl.u32 %v1915, 7
        %v1917 = vsub.s32 0, %v1916
        %v1918 = vrot.slane %v1913, %v1917
        %v1920 = vadd.f32 %v1911, %v1918
        %v1921 = vadd.f32 %v1912, %v1918
        %v1922 = vadd.f32 %v730, %v1920
        %v1923 = vadd.f32 %v731, %v1921
        %v1924 = vld [vmem:[%s694] sm:$0x1]
        %v1925 = vld [vmem:[%s697] sm:$0x1]
        %v1926 = vsel %vm756, %v1922, 0.0
        %1927 = vadd.xlane.f32.xlu0 %v1926
        %v1928 = vpop.xlane.xlu0 %1927
        %v1929 = vsel %vm756, %v1923, 0.0
        %1930 = vadd.xlane.f32.xlu0 %v1929
        %v1931 = vpop.xlane.xlu0 %1930
        %v1932 = vrcp.pop 32.0
        %v1933 = vmul.f32 %v1928, %v1932
        %v1934 = vmul.f32 %v1931, %v1932
        %v1935 = vsub.f32 %v1922, %v1933
        %v1936 = vsub.f32 %v1923, %v1934
        %v1937 = vmul.f32 %v1935, %v1935
        %v1938 = vmul.f32 %v1936, %v1936
        %v1939 = vsel %vm756, %v1937, 0.0
        %1940 = vadd.xlane.f32.xlu0 %v1939
        %v1941 = vpop.xlane.xlu0 %1940
        %v1942 = vsel %vm756, %v1938, 0.0
        %1943 = vadd.xlane.f32.xlu0 %v1942
        %v1944 = vpop.xlane.xlu0 %1943
        %v1945 = vmul.f32 %v1941, %v1932
        %v1946 = vmul.f32 %v1944, %v1932
        %v1947 = vadd.f32 %v1945, 1e-05
        %v1948 = vadd.f32 %v1946, 1e-05
        %v1949 = vrsqrt.pop %v1947
        %v1950 = vrsqrt.pop %v1948
        %v1951 = vmul.f32 %v1935, %v1949
        %v1952 = vmul.f32 %v1936, %v1950
        %v1954 = vlaneseq
        %v1955 = vshrl.u32 %v1954, 7
        %v1956 = vsub.s32 0, %v1955
        %v1957 = vrot.slane %v1924, %v1956
        %v1959 = vmul.f32 %v1951, %v1957
        %v1960 = vmul.f32 %v1952, %v1957
        %v1962 = vlaneseq
        %v1963 = vshrl.u32 %v1962, 7
        %v1964 = vsub.s32 0, %v1963
        %v1965 = vrot.slane %v1925, %v1964
        %v1967 = vadd.f32 %v1959, %v1965
        %v1968 = vadd.f32 %v1960, %v1965
        %v1969 = vpack.c.bf16 %v1968, %v1967
        %v1970 = vld [vmem:[%s702] sm:$0xf]
        %v1971 = vld [vmem:[%s702 + $0x4] sm:$0xf]
        %v1972 = vld [vmem:[%s702 + $0x8] sm:$0xf]
        %v1973 = vld [vmem:[%s702 + $0xc] sm:$0xf]
        %v1974 = vld [vmem:[%s705] sm:$0x1]
        %v1976 = vlaneseq
        %v1977 = vshrl.u32 %v1976, 7
        %v1978 = vsub.s32 0, %v1977
        %v1979 = vrot.slane %v1974, %v1978
        %v1985 = vunpack.c.l.b16 %v1970
        %v1986 = vunpack.c.l.b16 %v1971
        %v1987 = vunpack.c.l.b16 %v1972
        %v1988 = vunpack.c.l.b16 %v1973
        %v1989 = vpack.c.b16 %v1986, %v1985
        %v1990 = vpack.c.b16 %v1988, %v1987
        %v1994 = vsel %vm756, %v1969, 0
        %1996 = vmatprep.subr.bf16.mxu0 0
        %1997 = vmatpush1.bf16.msra.mxu0 %v1989
        %1998 = vmatprep.subr.bf16.mxu0 0
        %1999 = vmatpush1.bf16.msra.mxu0 %v1990
        %2000 = vmatprep.subr.bf16.mxu0 0
        %2001 = vmatpush1.bf16.msra.mxu0 0
        %2002 = vmatprep.subr.bf16.mxu0 0
        %2003 = vmatpush1.bf16.msra.mxu0 0
        %2004 = vmatprep.subr.bf16.mxu0 0
        %2005 = vmatpush1.bf16.msra.mxu0 0
        %2006 = vmatprep.subr.bf16.mxu0 0
        %2007 = vmatpush1.bf16.msra.mxu0 0
        %2008 = vmatprep.subr.bf16.mxu0 0
        %2009 = vmatpush1.bf16.msra.mxu0 0
        %2010 = vmatprep.subr.bf16.mxu0 0
        %2011 = vmatpush1.bf16.msra.mxu0 0
        %2012 = vmatprep.subr.bf16.mxu0 0
        %2013 = vmatpush1.bf16.msra.mxu0 0
        %2014 = vmatprep.subr.bf16.mxu0 0
        %2015 = vmatpush1.bf16.msra.mxu0 0
        %2016 = vmatprep.subr.bf16.mxu0 0
        %2017 = vmatpush1.bf16.msra.mxu0 0
        %2018 = vmatprep.subr.bf16.mxu0 0
        %2019 = vmatpush1.bf16.msra.mxu0 0
        %2020 = vmatprep.subr.bf16.mxu0 0
        %2021 = vmatpush1.bf16.msra.mxu0 0
        %2022 = vmatprep.subr.bf16.mxu0 0
        %2023 = vmatpush1.bf16.msra.mxu0 0
        %2024 = vmatprep.subr.bf16.mxu0 0
        %2025 = vmatpush1.bf16.msra.mxu0 0
        %2026 = vmatprep.subr.bf16.mxu0 0
        %2027 = vmatpush1.bf16.msra.mxu0 0
        %2028 = vmatprep.mubr.bf16.mxu0 0
        %2029 = vmatmul.mubr.bf16.gmra.mrb[0].mxu0 %v1994
        %v2030 = vpop.f32.mrb[0].mxu0
        %v2031 = vadd.f32 %v1979, %v2030
        %v2032 = vpop.f32.mrb[0].mxu0
        %v2033 = vpop.f32.mrb[0].mxu0
        %v2034 = vadd.f32 %v1979, %v2033
        %v2035 = vpop.f32.mrb[0].mxu0
        %2036 = vdwg.mxu0
        %v2037 = vmax.f32 %v2031, 0.0
        %v2038 = vmax.f32 %v2034, 0.0
        %v2039 = vpack.c.bf16 %v2038, %v2037
        %v2040 = vld [vmem:[%s710] sm:$0xf]
        %v2041 = vld [vmem:[%s710 + $0x4] sm:$0xf]
        %v2042 = vld [vmem:[%s710 + $0x8] sm:$0xf]
        %v2043 = vld [vmem:[%s710 + $0xc] sm:$0xf]
        %v2044 = vld [vmem:[%s710 + $0x10] sm:$0xf]
        %v2045 = vld [vmem:[%s710 + $0x14] sm:$0xf]
        %v2046 = vld [vmem:[%s710 + $0x18] sm:$0xf]
        %v2047 = vld [vmem:[%s710 + $0x1c] sm:$0xf]
        %v2048 = vld [vmem:[%s713] sm:$0x1]
        %v2050 = vlaneseq
        %v2051 = vshrl.u32 %v2050, 7
        %v2052 = vsub.s32 0, %v2051
        %v2053 = vrot.slane %v2048, %v2052
        %v2063 = vunpack.c.l.b16 %v2040
        %v2064 = vunpack.c.l.b16 %v2041
        %v2065 = vunpack.c.l.b16 %v2042
        %v2066 = vunpack.c.l.b16 %v2043
        %v2067 = vunpack.c.l.b16 %v2044
        %v2068 = vunpack.c.l.b16 %v2045
        %v2069 = vunpack.c.l.b16 %v2046
        %v2070 = vunpack.c.l.b16 %v2047
        %v2071 = vpack.c.b16 %v2064, %v2063
        %v2072 = vpack.c.b16 %v2066, %v2065
        %v2073 = vpack.c.b16 %v2068, %v2067
        %v2074 = vpack.c.b16 %v2070, %v2069
        %vm2079 = vcmask 523264
        %v2081 = vsel %vm2079, %v2039, 0
        %2083 = vmatprep.subr.bf16.mxu0 0
        %2084 = vmatpush1.bf16.msra.mxu0 %v2071
        %2085 = vmatprep.subr.bf16.mxu0 0
        %2086 = vmatpush1.bf16.msra.mxu0 %v2072
        %2087 = vmatprep.subr.bf16.mxu0 0
        %2088 = vmatpush1.bf16.msra.mxu0 %v2073
        %2089 = vmatprep.subr.bf16.mxu0 0
        %2090 = vmatpush1.bf16.msra.mxu0 %v2074
        %2091 = vmatprep.subr.bf16.mxu0 0
        %2092 = vmatpush1.bf16.msra.mxu0 0
        %2093 = vmatprep.subr.bf16.mxu0 0
        %2094 = vmatpush1.bf16.msra.mxu0 0
        %2095 = vmatprep.subr.bf16.mxu0 0
        %2096 = vmatpush1.bf16.msra.mxu0 0
        %2097 = vmatprep.subr.bf16.mxu0 0
        %2098 = vmatpush1.bf16.msra.mxu0 0
        %2099 = vmatprep.subr.bf16.mxu0 0
        %2100 = vmatpush1.bf16.msra.mxu0 0
        %2101 = vmatprep.subr.bf16.mxu0 0
        %2102 = vmatpush1.bf16.msra.mxu0 0
        %2103 = vmatprep.subr.bf16.mxu0 0
        %2104 = vmatpush1.bf16.msra.mxu0 0
        %2105 = vmatprep.subr.bf16.mxu0 0
        %2106 = vmatpush1.bf16.msra.mxu0 0
        %2107 = vmatprep.subr.bf16.mxu0 0
        %2108 = vmatpush1.bf16.msra.mxu0 0
        %2109 = vmatprep.subr.bf16.mxu0 0
        %2110 = vmatpush1.bf16.msra.mxu0 0
        %2111 = vmatprep.subr.bf16.mxu0 0
        %2112 = vmatpush1.bf16.msra.mxu0 0
        %2113 = vmatprep.subr.bf16.mxu0 0
        %2114 = vmatpush1.bf16.msra.mxu0 0
        %2115 = vmatprep.mubr.bf16.mxu0 0
        %2116 = vmatmul.mubr.bf16.gmra.mrb[0].mxu0 %v2081
        %v2117 = vpop.f32.mrb[0].mxu0
        %v2118 = vadd.f32 %v2053, %v2117
        %v2119 = vpop.f32.mrb[0].mxu0
        %v2120 = vpop.f32.mrb[0].mxu0
        %v2121 = vadd.f32 %v2053, %v2120
        %v2122 = vpop.f32.mrb[0].mxu0
        %2123 = vdwg.mxu0
        %v2124 = vadd.f32 %v1967, %v2118
        %v2125 = vadd.f32 %v1968, %v2121
        %v2126 = vld [vmem:[%s716] sm:$0x1]
        %v2127 = vld [vmem:[%s719] sm:$0x1]
        %v2128 = vsel %vm756, %v2124, 0.0
        %2129 = vadd.xlane.f32.xlu0 %v2128
        %v2130 = vpop.xlane.xlu0 %2129
        %v2131 = vsel %vm756, %v2125, 0.0
        %2132 = vadd.xlane.f32.xlu0 %v2131
        %v2133 = vpop.xlane.xlu0 %2132
        %v2134 = vmul.f32 %v2130, %v1932
        %v2135 = vmul.f32 %v2133, %v1932
        %v2136 = vsub.f32 %v2124, %v2134
        %v2137 = vsub.f32 %v2125, %v2135
        %v2138 = vmul.f32 %v2136, %v2136
        %v2139 = vmul.f32 %v2137, %v2137
        %v2140 = vsel %vm756, %v2138, 0.0
        %2141 = vadd.xlane.f32.xlu0 %v2140
        %v2142 = vpop.xlane.xlu0 %2141
        %v2143 = vsel %vm756, %v2139, 0.0
        %2144 = vadd.xlane.f32.xlu0 %v2143
        %v2145 = vpop.xlane.xlu0 %2144
        %v2146 = vmul.f32 %v2142, %v1932
        %v2147 = vmul.f32 %v2145, %v1932
        %v2148 = vadd.f32 %v2146, 1e-05
        %v2149 = vadd.f32 %v2147, 1e-05
        %v2150 = vrsqrt.pop %v2148
        %v2151 = vrsqrt.pop %v2149
        %v2152 = vmul.f32 %v2136, %v2150
        %v2153 = vmul.f32 %v2137, %v2151
        %v2155 = vlaneseq
        %v2156 = vshrl.u32 %v2155, 7
        %v2157 = vsub.s32 0, %v2156
        %v2158 = vrot.slane %v2126, %v2157
        %v2160 = vmul.f32 %v2152, %v2158
        %v2161 = vmul.f32 %v2153, %v2158
        %v2163 = vlaneseq
        %v2164 = vshrl.u32 %v2163, 7
        %v2165 = vsub.s32 0, %v2164
        %v2166 = vrot.slane %v2127, %v2165
        %v2168 = vadd.f32 %v2160, %v2166
        %v2169 = vadd.f32 %v2161, %v2166
        %p2170 = scmp.lt.s32.totalorder %s30, 1
        // Predicated region
        $region97: #{tpu_custom_call.1} parent=87 // pred_check
          %p2171 = pneg %p2170
        $region98: #{tpu_custom_call.1} parent=87 // pred_check_branch
          %2173 = sbr.rel (%p2171) target = $region100
        $region99: #{tpu_custom_call.1} parent=87 // pred_region
          %2174 = vst.msk [vmem:[#allocation2] sm:$0xff] %vm756, %v2168
          %2175 = vst.msk [vmem:[#allocation2 + $0x8] sm:$0xff] %vm756, %v2169
        $region100: #{tpu_custom_call.1} parent=87 // pred_fallthru
          _
        %p2176 = scmp.eq.s32.totalorder %s30, 1
        // Predicated region
        $region101: #{tpu_custom_call.1} parent=87 // pred_check
          %p2177 = pneg %p2176
        $region102: #{tpu_custom_call.1} parent=87 // pred_check_branch
          %2179 = sbr.rel (%p2177) target = $region104
        $region103: #{tpu_custom_call.1} parent=87 // pred_region
          %v2180 = vld [vmem:[%s2] sm:$0x3]
          %vm2181 = vcmask 130048
          %v2183 = vsel %vm2181, %v2180, 0
          %2185 = vmatprep.subr.mxu0 0.0
          %2186 = vmatpush1.msra.mxu0 %v2168
          %2187 = vmatprep.subr.mxu0 0.0
          %2188 = vmatpush1.msra.mxu0 %v2169
          %2189 = vmatprep.subr.mxu0 0.0
          %2190 = vmatpush1.msra.mxu0 0.0
          %2191 = vmatprep.subr.mxu0 0.0
          %2192 = vmatpush1.msra.mxu0 0.0
          %2193 = vmatprep.subr.mxu0 0.0
          %2194 = vmatpush1.msra.mxu0 0.0
          %2195 = vmatprep.subr.mxu0 0.0
          %2196 = vmatpush1.msra.mxu0 0.0
          %2197 = vmatprep.subr.mxu0 0.0
          %2198 = vmatpush1.msra.mxu0 0.0
          %2199 = vmatprep.subr.mxu0 0.0
          %2200 = vmatpush1.msra.mxu0 0.0
          %2201 = vmatprep.subr.mxu0 0.0
          %2202 = vmatpush1.msra.mxu0 0.0
          %2203 = vmatprep.subr.mxu0 0.0
          %2204 = vmatpush1.msra.mxu0 0.0
          %2205 = vmatprep.subr.mxu0 0.0
          %2206 = vmatpush1.msra.mxu0 0.0
          %2207 = vmatprep.subr.mxu0 0.0
          %2208 = vmatpush1.msra.mxu0 0.0
          %2209 = vmatprep.subr.mxu0 0.0
          %2210 = vmatpush1.msra.mxu0 0.0
          %2211 = vmatprep.subr.mxu0 0.0
          %2212 = vmatpush1.msra.mxu0 0.0
          %2213 = vmatprep.subr.mxu0 0.0
          %2214 = vmatpush1.msra.mxu0 0.0
          %2215 = vmatprep.subr.mxu0 0.0
          %2216 = vmatpush1.msra.mxu0 0.0
          %2217 = vmatprep.subr.mxu0 0.0
          %2218 = vmatpush1.msra.mxu0 0.0
          %2219 = vmatprep.subr.mxu0 0.0
          %2220 = vmatpush1.msra.mxu0 0.0
          %2221 = vmatprep.subr.mxu0 0.0
          %2222 = vmatpush1.msra.mxu0 0.0
          %2223 = vmatprep.subr.mxu0 0.0
          %2224 = vmatpush1.msra.mxu0 0.0
          %2225 = vmatprep.subr.mxu0 0.0
          %2226 = vmatpush1.msra.mxu0 0.0
          %2227 = vmatprep.subr.mxu0 0.0
          %2228 = vmatpush1.msra.mxu0 0.0
          %2229 = vmatprep.subr.mxu0 0.0
          %2230 = vmatpush1.msra.mxu0 0.0
          %2231 = vmatprep.subr.mxu0 0.0
          %2232 = vmatpush1.msra.mxu0 0.0
          %2233 = vmatprep.subr.mxu0 0.0
          %2234 = vmatpush1.msra.mxu0 0.0
          %2235 = vmatprep.subr.mxu0 0.0
          %2236 = vmatpush1.msra.mxu0 0.0
          %2237 = vmatprep.subr.mxu0 0.0
          %2238 = vmatpush1.msra.mxu0 0.0
          %2239 = vmatprep.subr.mxu0 0.0
          %2240 = vmatpush1.msra.mxu0 0.0
          %2241 = vmatprep.subr.mxu0 0.0
          %2242 = vmatpush1.msra.mxu0 0.0
          %2243 = vmatprep.subr.mxu0 0.0
          %2244 = vmatpush1.msra.mxu0 0.0
          %2245 = vmatprep.subr.mxu0 0.0
          %2246 = vmatpush1.msra.mxu0 0.0
          %2247 = vmatprep.subr.mxu0 0.0
          %2248 = vmatpush1.msra.mxu0 0.0
          %2249 = vmatprep.mubr.f32.mxu0 0.0
          %2250 = vmatmul.mubr.f32.gmra.mrb[0].mxu0 %v2183
          %v2251 = vpop.f32.mrb[0].mxu0
          %v2252 = vadd.f32 0.0, %v2251
          %v2253 = vpop.f32.mrb[0].mxu0
          %2254 = vdwg.mxu0
          %v2255 = vld [vmem:[%s3] sm:$0xff]
          %v2256 = vld [vmem:[%s3 + $0x8] sm:$0xff]
          %v2257 = vld [vmem:[%s3 + $0x10] sm:$0xff]
          %v2258 = vld [vmem:[%s3 + $0x18] sm:$0xff]
          %v2259 = vld [vmem:[#allocation3] sm:$0x1]
          %v2261 = vlaneseq
          %v2262 = vshrl.u32 %v2261, 7
          %v2263 = vsub.s32 0, %v2262
          %v2264 = vrot.slane %v2259, %v2263
          %v2267 = vsel %vm756, %v2252, 0
          %2269 = vmatprep.subr.mxu0 0.0
          %2270 = vmatpush1.msra.mxu0 %v2255
          %2271 = vmatprep.subr.mxu0 0.0
          %2272 = vmatpush1.msra.mxu0 %v2256
          %2273 = vmatprep.subr.mxu0 0.0
          %2274 = vmatpush1.msra.mxu0 %v2257
          %2275 = vmatprep.subr.mxu0 0.0
          %2276 = vmatpush1.msra.mxu0 %v2258
          %2277 = vmatprep.subr.mxu0 0.0
          %2278 = vmatpush1.msra.mxu0 0.0
          %2279 = vmatprep.subr.mxu0 0.0
          %2280 = vmatpush1.msra.mxu0 0.0
          %2281 = vmatprep.subr.mxu0 0.0
          %2282 = vmatpush1.msra.mxu0 0.0
          %2283 = vmatprep.subr.mxu0 0.0
          %2284 = vmatpush1.msra.mxu0 0.0
          %2285 = vmatprep.subr.mxu0 0.0
          %2286 = vmatpush1.msra.mxu0 0.0
          %2287 = vmatprep.subr.mxu0 0.0
          %2288 = vmatpush1.msra.mxu0 0.0
          %2289 = vmatprep.subr.mxu0 0.0
          %2290 = vmatpush1.msra.mxu0 0.0
          %2291 = vmatprep.subr.mxu0 0.0
          %2292 = vmatpush1.msra.mxu0 0.0
          %2293 = vmatprep.subr.mxu0 0.0
          %2294 = vmatpush1.msra.mxu0 0.0
          %2295 = vmatprep.subr.mxu0 0.0
          %2296 = vmatpush1.msra.mxu0 0.0
          %2297 = vmatprep.subr.mxu0 0.0
          %2298 = vmatpush1.msra.mxu0 0.0
          %2299 = vmatprep.subr.mxu0 0.0
          %2300 = vmatpush1.msra.mxu0 0.0
          %2301 = vmatprep.subr.mxu0 0.0
          %2302 = vmatpush1.msra.mxu0 0.0
          %2303 = vmatprep.subr.mxu0 0.0
          %2304 = vmatpush1.msra.mxu0 0.0
          %2305 = vmatprep.subr.mxu0 0.0
          %2306 = vmatpush1.msra.mxu0 0.0
          %2307 = vmatprep.subr.mxu0 0.0
          %2308 = vmatpush1.msra.mxu0 0.0
          %2309 = vmatprep.subr.mxu0 0.0
          %2310 = vmatpush1.msra.mxu0 0.0
          %2311 = vmatprep.subr.mxu0 0.0
          %2312 = vmatpush1.msra.mxu0 0.0
          %2313 = vmatprep.subr.mxu0 0.0
          %2314 = vmatpush1.msra.mxu0 0.0
          %2315 = vmatprep.subr.mxu0 0.0
          %2316 = vmatpush1.msra.mxu0 0.0
          %2317 = vmatprep.subr.mxu0 0.0
          %2318 = vmatpush1.msra.mxu0 0.0
          %2319 = vmatprep.subr.mxu0 0.0
          %2320 = vmatpush1.msra.mxu0 0.0
          %2321 = vmatprep.subr.mxu0 0.0
          %2322 = vmatpush1.msra.mxu0 0.0
          %2323 = vmatprep.subr.mxu0 0.0
          %2324 = vmatpush1.msra.mxu0 0.0
          %2325 = vmatprep.subr.mxu0 0.0
          %2326 = vmatpush1.msra.mxu0 0.0
          %2327 = vmatprep.subr.mxu0 0.0
          %2328 = vmatpush1.msra.mxu0 0.0
          %2329 = vmatprep.subr.mxu0 0.0
          %2330 = vmatpush1.msra.mxu0 0.0
          %2331 = vmatprep.subr.mxu0 0.0
          %2332 = vmatpush1.msra.mxu0 0.0
          %2333 = vmatprep.mubr.f32.mxu0 0.0
          %2334 = vmatmul.mubr.f32.gmra.mrb[0].mxu0 %v2267
          %v2335 = vpop.f32.mrb[0].mxu0
          %v2336 = vadd.f32 %v2264, %v2335
          %v2337 = vpop.f32.mrb[0].mxu0
          %2338 = vdwg.mxu0
          %vm2339 = vcmask 33792
          %2340 = vst.msk [vmem:[#allocation6] sm:$0x3] %vm2339, %v2336
        $region104: #{tpu_custom_call.1} parent=87 // pred_fallthru
          _
        // Predicated region
        $region105: #{tpu_custom_call.1} parent=87 // pred_check
          %p2341 = pneg %p460
        $region106: #{tpu_custom_call.1} parent=87 // pred_check_branch
          %2343 = sbr.rel (%p2341) target = $region108
        $region107: #{tpu_custom_call.1} parent=87 // pred_region
          %s2345 = ssub.s32 32, 32
          %2346 = vsyncadd [#allocation5], %s2345
          %s2348 = sshll.u32 [#allocation6], 4
          %s2349 = int_to_ptr.vmem [resolvable:$true] %s2348
          %2351 = dma.vmem_to_hbm [thread:$0]  %s2349, 32, %s17, [#allocation5]
        $region108: #{tpu_custom_call.1} parent=87 // pred_fallthru
          _
        // Predicated region
        $region109: #{tpu_custom_call.1} parent=87 // pred_check
          %p2352 = pneg %p460
        $region110: #{tpu_custom_call.1} parent=87 // pred_check_branch
          %2354 = sbr.rel (%p2352) target = $region112
        $region111: #{tpu_custom_call.1} parent=87 // pred_region
          %2355 = dma.done [#allocation5], 32
        $region112: #{tpu_custom_call.1} parent=87 // pred_fallthru
          _
      $region88: #{tpu_custom_call.1} parent=5 // pred_fallthru
        _
      %p2356 = scmp.le.s32.totalorder 2, %s25
      // Predicated region
      $region113: #{tpu_custom_call.1} parent=5 // pred_check
        %p2357 = pneg %p2356
      $region114: #{tpu_custom_call.1} parent=5 // pred_check_branch
        %2359 = sbr.rel (%p2357) target = $region116
      $region115: #{tpu_custom_call.1} parent=5 // pred_region
        %s2360 = ssub.s32 %s25, 2
      $region116: #{tpu_custom_call.1} parent=5 // pred_fallthru
        _
    $region6: #{tpu_custom_call.1} parent=1 // loop_footer
      %s29 = sadd.s32 1, %s25
    $region7: #{tpu_custom_call.1} parent=1 // loop_footer_branch
      %24 = sbr.rel target = $region3
    $region8: #{tpu_custom_call.1} parent=1 // loop_exit
      _
    %2361 = vsyncpa [#allocation4], 1
    %s2362 = scalar_lea.sflag [#allocation4], 1
    %2363 = vsyncpa %s2362, 1
    %2364 = vsyncpa [#allocation5], 1
    %s2365 = scalar_lea.sflag [#allocation5], 1
    %2366 = vsyncpa %s2365, 1

</llo_original>
